<compile_context>
chip_gen: v5e
topology: v5e:2x2
jax: 0.10.0
libtpu: 0.0.40
codegen_flags: <defaults>
</compile_context>

<pallas_src>
import jax
import jax.numpy as jnp
from jax import lax
from jax.experimental import pallas as pl
from jax.experimental.pallas import tpu as pltpu

EPS = 1e-12  # matches LayerNorm((256,), eps=1e-12) in the PyTorch module


def add_layernorm_kernel(x_ref, y_ref, g_ref, b_ref, o_ref):
    # x_ref, y_ref, o_ref: (TM, H); g_ref, b_ref: (1, H) broadcast over rows
    s = x_ref[...] + y_ref[...]                        # x237 + x233
    mean = jnp.mean(s, axis=-1, keepdims=True)         # per-row mean over hidden
    centered = s - mean
    var = jnp.mean(centered * centered, axis=-1, keepdims=True)
    inv = lax.rsqrt(var + EPS)                         # EUP rsqrt (not sqrt+div)
    o_ref[...] = (centered * inv) * g_ref[...] + b_ref[...]


def _tensorcores_per_chip() -> int:
    """Best-effort TensorCores/chip: 1 on v5e/v6e, 2 on v7x."""
    try:
        info = pltpu.get_tpu_info()
        for attr in ("num_tensorcores", "tensorcores_per_chip", "tensorcore_count"):
            v = getattr(info, attr, None)
            if isinstance(v, int) and v in (1, 2):
                return v
    except Exception:
        pass
    try:
        kind = jax.devices()[0].device_kind.lower()
        if "v7" in kind:
            return 2
    except Exception:
        pass
    return 1


def _pick_tm(M: int, H: int, itemsize: int, num_cores: int) -> int:
    """One block per TensorCore, multiple of 8 rows, divisor of M, VMEM-safe."""
    # Budget: x, y, out tiles, double-buffered; stay well under the 32 MiB
    # default scoped-VMEM limit (64 MiB physical on v7x).
    budget = 16 * 1024 * 1024
    cap = max(8, budget // (3 * 2 * H * itemsize))
    tm = M // num_cores if (num_cores > 1 and M % num_cores == 0) else M
    tm = min(tm, cap)
    if tm >= M:
        return M  # full-array block is always legal w.r.t. (8,128) tiling
    tm = max(8, (tm // 8) * 8)
    while tm > 8 and M % tm != 0:
        tm -= 8
    if M % tm != 0:
        return M
    return tm


def add_layernorm(x237, x233, gamma, beta):
    B, S, H = x237.shape
    M = B * S
    num_cores = _tensorcores_per_chip()
    tm = _pick_tm(M, H, jnp.dtype(x237.dtype).itemsize, num_cores)
    grid = (M // tm,)

    xf = x237.reshape(M, H)
    yf = x233.reshape(M, H)
    g2 = gamma.reshape(1, H)
    b2 = beta.reshape(1, H)

    def build(semantics):
        return pl.pallas_call(
            add_layernorm_kernel,
            out_shape=jax.ShapeDtypeStruct((M, H), x237.dtype),
            grid_spec=pl.GridSpec(
                grid=grid,
                in_specs=[
                    pl.BlockSpec((tm, H), lambda i: (i, 0)),
                    pl.BlockSpec((tm, H), lambda i: (i, 0)),
                    pl.BlockSpec((1, H), lambda i: (0, 0)),  # gamma resident
                    pl.BlockSpec((1, H), lambda i: (0, 0)),  # beta resident
                ],
                out_specs=pl.BlockSpec((tm, H), lambda i: (i, 0)),
            ),
            compiler_params=pltpu.CompilerParams(dimension_semantics=semantics),
        )

    if grid[0] > 1 and num_cores > 1:
        # v7x: force one block per TensorCore; fall back if core-parallel
        # codegen is not available for this grid.
        try:
            out = build((pltpu.CORE_PARALLEL,))(xf, yf, g2, b2)
        except Exception:
            out = build(("parallel",))(xf, yf, g2, b2)
    else:
        out = build(("parallel",))(xf, yf, g2, b2)
    return out.reshape(B, S, H)


if __name__ == "__main__":
    key = jax.random.PRNGKey(0)
    k1, k2 = jax.random.split(key)
    B, S, H = 1, 384, 256
    x237 = jax.random.normal(k1, (B, S, H), dtype=jnp.float32)
    x233 = jax.random.normal(k2, (B, S, H), dtype=jnp.float32)

    # LayerNorm((256,), eps=1e-12, elementwise_affine=True) default init
    gamma = jnp.ones((H,), dtype=jnp.float32)
    beta = jnp.zeros((H,), dtype=jnp.float32)

    out = add_layernorm(x237, x233, gamma, beta)
    jax.block_until_ready(out)

    # reference check in plain JAX
    s = x237 + x233
    mean = jnp.mean(s, axis=-1, keepdims=True)
    var = jnp.mean((s - mean) ** 2, axis=-1, keepdims=True)
    ref = (s - mean) * lax.rsqrt(var + EPS) * gamma + beta
    assert jnp.allclose(out, ref, atol=1e-5, rtol=1e-5)

    print("KERNEL_OK")
</pallas_src>

<mosaic_0001>
module attributes {stable_mosaic.version = 11 : i64} {
  func.func @add_layernorm_kernel(%arg0: i32, %arg1: memref<384x256xf32, #tpu.memory_space<vmem>>, %arg2: memref<384x256xf32, #tpu.memory_space<vmem>>, %arg3: memref<1x256xf32, #tpu.memory_space<vmem>>, %arg4: memref<1x256xf32, #tpu.memory_space<vmem>>, %arg5: memref<384x256xf32, #tpu.memory_space<vmem>>) attributes {dimension_semantics = [#tpu.dimension_semantics<parallel>], iteration_bounds = array<i64: 1>, scalar_prefetch = 0 : i64, scratch_operands = 0 : i64, tpu.core_type = #tpu.core_type<tc>, window_params = [{transform_indices = @transform_0, window_bounds = array<i64: 384, 256>}, {transform_indices = @transform_1, window_bounds = array<i64: 384, 256>}, {pipeline_mode = #tpu.pipeline_mode<synchronous>, transform_indices = @transform_2, window_bounds = array<i64: 1, 256>}, {pipeline_mode = #tpu.pipeline_mode<synchronous>, transform_indices = @transform_3, window_bounds = array<i64: 1, 256>}, {transform_indices = @transform_4, window_bounds = array<i64: 384, 256>}]} {
    %c0 = arith.constant 0 : index
    %c0_0 = arith.constant 0 : index
    %0 = vector.load %arg1[%c0, %c0_0] : memref<384x256xf32, #tpu.memory_space<vmem>>, vector<384x256xf32>
    %c0_1 = arith.constant 0 : index
    %c0_2 = arith.constant 0 : index
    %1 = vector.load %arg2[%c0_1, %c0_2] : memref<384x256xf32, #tpu.memory_space<vmem>>, vector<384x256xf32>
    %2 = arith.addf %0, %1 : vector<384x256xf32>
    %cst = arith.constant dense<0.000000e+00> : vector<384xf32>
    %3 = vector.multi_reduction <add>, %2, %cst [1] : vector<384x256xf32> to vector<384xf32>
    %4 = vector.shape_cast %3 : vector<384xf32> to vector<384x1xf32>
    %cst_3 = arith.constant 2.560000e+02 : f32
    %5 = vector.broadcast %cst_3 : f32 to vector<384x1xf32>
    %6 = arith.divf %4, %5 : vector<384x1xf32>
    %7 = vector.broadcast %6 : vector<384x1xf32> to vector<384x256xf32>
    %8 = arith.subf %2, %7 : vector<384x256xf32>
    %9 = arith.mulf %8, %8 : vector<384x256xf32>
    %cst_4 = arith.constant dense<0.000000e+00> : vector<384xf32>
    %10 = vector.multi_reduction <add>, %9, %cst_4 [1] : vector<384x256xf32> to vector<384xf32>
    %11 = vector.shape_cast %10 : vector<384xf32> to vector<384x1xf32>
    %cst_5 = arith.constant 2.560000e+02 : f32
    %12 = vector.broadcast %cst_5 : f32 to vector<384x1xf32>
    %13 = arith.divf %11, %12 : vector<384x1xf32>
    %cst_6 = arith.constant 9.99999996E-13 : f32
    %14 = vector.broadcast %cst_6 : f32 to vector<384x1xf32>
    %15 = arith.addf %13, %14 : vector<384x1xf32>
    %16 = math.rsqrt %15 : vector<384x1xf32>
    %17 = vector.broadcast %16 : vector<384x1xf32> to vector<384x256xf32>
    %18 = arith.mulf %8, %17 : vector<384x256xf32>
    %c0_7 = arith.constant 0 : index
    %c0_8 = arith.constant 0 : index
    %19 = vector.load %arg3[%c0_7, %c0_8] : memref<1x256xf32, #tpu.memory_space<vmem>>, vector<1x256xf32>
    %20 = vector.broadcast %19 : vector<1x256xf32> to vector<384x256xf32>
    %21 = arith.mulf %18, %20 : vector<384x256xf32>
    %c0_9 = arith.constant 0 : index
    %c0_10 = arith.constant 0 : index
    %22 = vector.load %arg4[%c0_9, %c0_10] : memref<1x256xf32, #tpu.memory_space<vmem>>, vector<1x256xf32>
    %23 = vector.broadcast %22 : vector<1x256xf32> to vector<384x256xf32>
    %24 = arith.addf %21, %23 : vector<384x256xf32>
    %c0_11 = arith.constant 0 : index
    %c0_12 = arith.constant 0 : index
    %25 = vector.load %arg5[%c0_11, %c0_12] : memref<384x256xf32, #tpu.memory_space<vmem>>, vector<384x256xf32>
    tpu.vector_store %arg5[%c0_11, %c0_12], %24 {strides = array<i32>} : memref<384x256xf32, #tpu.memory_space<vmem>>, vector<384x256xf32>,
    return
  }
  func.func @transform_0(%arg0: i32) -> (i32, i32) {
    %c0_i32 = arith.constant 0 : i32
    %c0_i32_0 = arith.constant 0 : i32
    return %arg0, %c0_i32 : i32, i32
  }
  func.func @transform_1(%arg0: i32) -> (i32, i32) {
    %c0_i32 = arith.constant 0 : i32
    %c0_i32_0 = arith.constant 0 : i32
    return %arg0, %c0_i32 : i32, i32
  }
  func.func @transform_2(%arg0: i32) -> (i32, i32) {
    %c0_i32 = arith.constant 0 : i32
    %c0_i32_0 = arith.constant 0 : i32
    %c0_i32_1 = arith.constant 0 : i32
    return %c0_i32, %c0_i32_0 : i32, i32
  }
  func.func @transform_3(%arg0: i32) -> (i32, i32) {
    %c0_i32 = arith.constant 0 : i32
    %c0_i32_0 = arith.constant 0 : i32
    %c0_i32_1 = arith.constant 0 : i32
    return %c0_i32, %c0_i32_0 : i32, i32
  }
  func.func @transform_4(%arg0: i32) -> (i32, i32) {
    %c0_i32 = arith.constant 0 : i32
    %c0_i32_0 = arith.constant 0 : i32
    return %arg0, %c0_i32 : i32, i32
  }
}

</mosaic_0001>

<llo_original>
// kernel: tpu_custom_call.1
$region0: #{tpu_custom_call.1}
  #allocation0 [shape = 'u32[]', space=smem, size = 0x4, offset = 0x4, fixed_abs, tag = 'smem constant byte address 0x4 - core index']
  #allocation1 [shape = 'u32[72,128]{1,0:T(1,128)}', space=vmem, size = 0x9000, scoped, tag = 'internal scratch']
  %s0 = inlined_call_operand.hbm [shape: f32[384,256], index: 0, kind: input, shape index: {}]
  %s1 = inlined_call_operand.hbm [shape: f32[384,256], index: 1, kind: input, shape index: {}]
  %s2 = inlined_call_operand.hbm [shape: f32[1,256], index: 2, kind: input, shape index: {}]
  %s3 = inlined_call_operand.vmem [shape: f32[1,256], index: 3, kind: input, shape index: {}]
  %s4 = inlined_call_operand.hbm [shape: f32[384,256], index: 4, kind: output, shape index: {}]
  %s5 = sld [smem:[#allocation0]]
  $region38: #{tpu_custom_call.1} parent=0
    _
  %s7 = ssub.s32 1, %s5
  %s8 = scalar_select 0, %s7, %s5
  $region1: #{tpu_custom_call.1} parent=0
    #allocation2 [shape = 'u8[393216]{0}', space=vmem, size = 0x60000, scoped, tag = 'input window, operand 0, single buffered']
    #allocation3 [shape = 's32[1]{0}', space=sflag, size = 0x4, scoped, tag = 'scoped memory for tpu_custom_call.1']
    #allocation4 [shape = 's32[1]{0}', space=sflag, size = 0x4, scoped, tag = 'scoped memory for tpu_custom_call.1']
    #allocation5 [shape = 'u8[393216]{0}', space=vmem, size = 0x60000, scoped, tag = 'input window, operand 1, single buffered']
    #allocation6 [shape = 's32[1]{0}', space=sflag, size = 0x4, scoped, tag = 'scoped memory for tpu_custom_call.1']
    #allocation7 [shape = 'u8[1024]{0}', space=vmem, size = 0x400, scoped, tag = 'input window, operand 2, single buffered']
    #allocation8 [shape = 'u8[393216]{0}', space=vmem, size = 0x60000, scoped, tag = 'output window, operand 0, single buffered']
    %9 = vsyncpa [#allocation3], 0
    %10 = vsyncpa [#allocation6], 0
    %11 = vsyncpa [#allocation4], 0
    // Predicated region
    $region2: #{tpu_custom_call.1} parent=1 // pred_check
      _
    $region3: #{tpu_custom_call.1} parent=1 // pred_check_branch
      %13 = sbr.rel (0) target = $region5
    $region4: #{tpu_custom_call.1} parent=1 // pred_region
      %15 = vsyncadd [#allocation3], 0
      %s16 = sshll.u32 %s0, 4
      %s17 = int_to_ptr.hbm [resolvable:$true] %s16
      %s18 = sshll.u32 [#allocation2], 4
      %s19 = int_to_ptr.vmem [resolvable:$true] %s18
      %24 = dma.hbm_to_vmem [thread:$0]  %s17, 12288, %s19, [#allocation3], 256, 256, 16
    $region5: #{tpu_custom_call.1} parent=1 // pred_fallthru
      _
    // Predicated region
    $region6: #{tpu_custom_call.1} parent=1 // pred_check
      _
    $region7: #{tpu_custom_call.1} parent=1 // pred_check_branch
      %26 = sbr.rel (0) target = $region9
    $region8: #{tpu_custom_call.1} parent=1 // pred_region
      %28 = vsyncadd [#allocation6], 0
      %s29 = sshll.u32 %s1, 4
      %s30 = int_to_ptr.hbm [resolvable:$true] %s29
      %s31 = sshll.u32 [#allocation5], 4
      %s32 = int_to_ptr.vmem [resolvable:$true] %s31
      %37 = dma.hbm_to_vmem [thread:$0]  %s30, 12288, %s32, [#allocation6], 256, 256, 16
    $region9: #{tpu_custom_call.1} parent=1 // pred_fallthru
      _
    // Predicated region
    $region10: #{tpu_custom_call.1} parent=1 // pred_check
      _
    $region11: #{tpu_custom_call.1} parent=1 // pred_check_branch
      %39 = sbr.rel (0) target = $region13
    $region12: #{tpu_custom_call.1} parent=1 // pred_region
      %41 = vsyncadd [#allocation6], 0
      %s43 = sshll.u32 %s2, 4
      %s44 = int_to_ptr.hbm [resolvable:$true] %s43
      %s45 = sshll.u32 [#allocation7], 4
      %s46 = int_to_ptr.vmem [resolvable:$true] %s45
      %48 = dma.hbm_to_vmem [thread:$0]  %s44, 32, %s46, [#allocation6]
    $region13: #{tpu_custom_call.1} parent=1 // pred_fallthru
      _
    // Predicated region
    $region14: #{tpu_custom_call.1} parent=1 // pred_check
      _
    $region15: #{tpu_custom_call.1} parent=1 // pred_check_branch
      %50 = sbr.rel (0) target = $region17
    $region16: #{tpu_custom_call.1} parent=1 // pred_region
      _
    $region17: #{tpu_custom_call.1} parent=1 // pred_fallthru
      _
    // Predicated region
    $region18: #{tpu_custom_call.1} parent=1 // pred_check
      _
    $region19: #{tpu_custom_call.1} parent=1 // pred_check_branch
      %52 = sbr.rel (0) target = $region21
    $region20: #{tpu_custom_call.1} parent=1 // pred_region
      %54 = dma.done [#allocation3], 12288
    $region21: #{tpu_custom_call.1} parent=1 // pred_fallthru
      _
    // Predicated region
    $region22: #{tpu_custom_call.1} parent=1 // pred_check
      _
    $region23: #{tpu_custom_call.1} parent=1 // pred_check_branch
      %56 = sbr.rel (0) target = $region25
    $region24: #{tpu_custom_call.1} parent=1 // pred_region
      %58 = dma.done [#allocation6], 12288
    $region25: #{tpu_custom_call.1} parent=1 // pred_fallthru
      _
    // Predicated region
    $region26: #{tpu_custom_call.1} parent=1 // pred_check
      _
    $region27: #{tpu_custom_call.1} parent=1 // pred_check_branch
      %60 = sbr.rel (0) target = $region29
    $region28: #{tpu_custom_call.1} parent=1 // pred_region
      %62 = dma.done [#allocation6], 32
    $region29: #{tpu_custom_call.1} parent=1 // pred_fallthru
      _
    %v63 = vld [vmem:[#allocation2] sm:$0xff]
    %v64 = vld [vmem:[#allocation2 + $0x8] sm:$0xff]
    %v65 = vld [vmem:[#allocation2 + $0x10] sm:$0xff]
    %v66 = vld [vmem:[#allocation2 + $0x18] sm:$0xff]
    %v67 = vld [vmem:[#allocation2 + $0x20] sm:$0xff]
    %v68 = vld [vmem:[#allocation2 + $0x28] sm:$0xff]
    %v69 = vld [vmem:[#allocation2 + $0x30] sm:$0xff]
    %v70 = vld [vmem:[#allocation2 + $0x38] sm:$0xff]
    %v71 = vld [vmem:[#allocation2 + $0x40] sm:$0xff]
    %v72 = vld [vmem:[#allocation2 + $0x48] sm:$0xff]
    %v73 = vld [vmem:[#allocation2 + $0x50] sm:$0xff]
    %v74 = vld [vmem:[#allocation2 + $0x58] sm:$0xff]
    %v75 = vld [vmem:[#allocation2 + $0x60] sm:$0xff]
    %v76 = vld [vmem:[#allocation2 + $0x68] sm:$0xff]
    %v77 = vld [vmem:[#allocation2 + $0x70] sm:$0xff]
    %v78 = vld [vmem:[#allocation2 + $0x78] sm:$0xff]
    %v79 = vld [vmem:[#allocation2 + $0x80] sm:$0xff]
    %v80 = vld [vmem:[#allocation2 + $0x88] sm:$0xff]
    %v81 = vld [vmem:[#allocation2 + $0x90] sm:$0xff]
    %v82 = vld [vmem:[#allocation2 + $0x98] sm:$0xff]
    %v83 = vld [vmem:[#allocation2 + $0xa0] sm:$0xff]
    %v84 = vld [vmem:[#allocation2 + $0xa8] sm:$0xff]
    %v85 = vld [vmem:[#allocation2 + $0xb0] sm:$0xff]
    %v86 = vld [vmem:[#allocation2 + $0xb8] sm:$0xff]
    %v87 = vld [vmem:[#allocation2 + $0xc0] sm:$0xff]
    %v88 = vld [vmem:[#allocation2 + $0xc8] sm:$0xff]
    %v89 = vld [vmem:[#allocation2 + $0xd0] sm:$0xff]
    %v90 = vld [vmem:[#allocation2 + $0xd8] sm:$0xff]
    %v91 = vld [vmem:[#allocation2 + $0xe0] sm:$0xff]
    %v92 = vld [vmem:[#allocation2 + $0xe8] sm:$0xff]
    %v93 = vld [vmem:[#allocation2 + $0xf0] sm:$0xff]
    %v94 = vld [vmem:[#allocation2 + $0xf8] sm:$0xff]
    %v95 = vld [vmem:[#allocation2 + $0x100] sm:$0xff]
    %v96 = vld [vmem:[#allocation2 + $0x108] sm:$0xff]
    %v97 = vld [vmem:[#allocation2 + $0x110] sm:$0xff]
    %v98 = vld [vmem:[#allocation2 + $0x118] sm:$0xff]
    %v99 = vld [vmem:[#allocation2 + $0x120] sm:$0xff]
    %v100 = vld [vmem:[#allocation2 + $0x128] sm:$0xff]
    %v101 = vld [vmem:[#allocation2 + $0x130] sm:$0xff]
    %v102 = vld [vmem:[#allocation2 + $0x138] sm:$0xff]
    %v103 = vld [vmem:[#allocation2 + $0x140] sm:$0xff]
    %v104 = vld [vmem:[#allocation2 + $0x148] sm:$0xff]
    %v105 = vld [vmem:[#allocation2 + $0x150] sm:$0xff]
    %v106 = vld [vmem:[#allocation2 + $0x158] sm:$0xff]
    %v107 = vld [vmem:[#allocation2 + $0x160] sm:$0xff]
    %v108 = vld [vmem:[#allocation2 + $0x168] sm:$0xff]
    %v109 = vld [vmem:[#allocation2 + $0x170] sm:$0xff]
    %v110 = vld [vmem:[#allocation2 + $0x178] sm:$0xff]
    %v111 = vld [vmem:[#allocation2 + $0x180] sm:$0xff]
    %v112 = vld [vmem:[#allocation2 + $0x188] sm:$0xff]
    %v113 = vld [vmem:[#allocation2 + $0x190] sm:$0xff]
    %v114 = vld [vmem:[#allocation2 + $0x198] sm:$0xff]
    %v115 = vld [vmem:[#allocation2 + $0x1a0] sm:$0xff]
    %v116 = vld [vmem:[#allocation2 + $0x1a8] sm:$0xff]
    %v117 = vld [vmem:[#allocation2 + $0x1b0] sm:$0xff]
    %v118 = vld [vmem:[#allocation2 + $0x1b8] sm:$0xff]
    %v119 = vld [vmem:[#allocation2 + $0x1c0] sm:$0xff]
    %v120 = vld [vmem:[#allocation2 + $0x1c8] sm:$0xff]
    %v121 = vld [vmem:[#allocation2 + $0x1d0] sm:$0xff]
    %v122 = vld [vmem:[#allocation2 + $0x1d8] sm:$0xff]
    %v123 = vld [vmem:[#allocation2 + $0x1e0] sm:$0xff]
    %v124 = vld [vmem:[#allocation2 + $0x1e8] sm:$0xff]
    %v125 = vld [vmem:[#allocation2 + $0x1f0] sm:$0xff]
    %v126 = vld [vmem:[#allocation2 + $0x1f8] sm:$0xff]
    %v127 = vld [vmem:[#allocation2 + $0x200] sm:$0xff]
    %v128 = vld [vmem:[#allocation2 + $0x208] sm:$0xff]
    %v129 = vld [vmem:[#allocation2 + $0x210] sm:$0xff]
    %v130 = vld [vmem:[#allocation2 + $0x218] sm:$0xff]
    %v131 = vld [vmem:[#allocation2 + $0x220] sm:$0xff]
    %v132 = vld [vmem:[#allocation2 + $0x228] sm:$0xff]
    %v133 = vld [vmem:[#allocation2 + $0x230] sm:$0xff]
    %v134 = vld [vmem:[#allocation2 + $0x238] sm:$0xff]
    %v135 = vld [vmem:[#allocation2 + $0x240] sm:$0xff]
    %v136 = vld [vmem:[#allocation2 + $0x248] sm:$0xff]
    %v137 = vld [vmem:[#allocation2 + $0x250] sm:$0xff]
    %v138 = vld [vmem:[#allocation2 + $0x258] sm:$0xff]
    %v139 = vld [vmem:[#allocation2 + $0x260] sm:$0xff]
    %v140 = vld [vmem:[#allocation2 + $0x268] sm:$0xff]
    %v141 = vld [vmem:[#allocation2 + $0x270] sm:$0xff]
    %v142 = vld [vmem:[#allocation2 + $0x278] sm:$0xff]
    %v143 = vld [vmem:[#allocation2 + $0x280] sm:$0xff]
    %v144 = vld [vmem:[#allocation2 + $0x288] sm:$0xff]
    %v145 = vld [vmem:[#allocation2 + $0x290] sm:$0xff]
    %v146 = vld [vmem:[#allocation2 + $0x298] sm:$0xff]
    %v147 = vld [vmem:[#allocation2 + $0x2a0] sm:$0xff]
    %v148 = vld [vmem:[#allocation2 + $0x2a8] sm:$0xff]
    %v149 = vld [vmem:[#allocation2 + $0x2b0] sm:$0xff]
    %v150 = vld [vmem:[#allocation2 + $0x2b8] sm:$0xff]
    %v151 = vld [vmem:[#allocation2 + $0x2c0] sm:$0xff]
    %v152 = vld [vmem:[#allocation2 + $0x2c8] sm:$0xff]
    %v153 = vld [vmem:[#allocation2 + $0x2d0] sm:$0xff]
    %v154 = vld [vmem:[#allocation2 + $0x2d8] sm:$0xff]
    %v155 = vld [vmem:[#allocation2 + $0x2e0] sm:$0xff]
    %v156 = vld [vmem:[#allocation2 + $0x2e8] sm:$0xff]
    %v157 = vld [vmem:[#allocation2 + $0x2f0] sm:$0xff]
    %v158 = vld [vmem:[#allocation2 + $0x2f8] sm:$0xff]
    %v159 = vld [vmem:[#allocation5] sm:$0xff]
    %v160 = vld [vmem:[#allocation5 + $0x8] sm:$0xff]
    %v161 = vld [vmem:[#allocation5 + $0x10] sm:$0xff]
    %v162 = vld [vmem:[#allocation5 + $0x18] sm:$0xff]
    %v163 = vld [vmem:[#allocation5 + $0x20] sm:$0xff]
    %v164 = vld [vmem:[#allocation5 + $0x28] sm:$0xff]
    %v165 = vld [vmem:[#allocation5 + $0x30] sm:$0xff]
    %v166 = vld [vmem:[#allocation5 + $0x38] sm:$0xff]
    %v167 = vld [vmem:[#allocation5 + $0x40] sm:$0xff]
    %v168 = vld [vmem:[#allocation5 + $0x48] sm:$0xff]
    %v169 = vld [vmem:[#allocation5 + $0x50] sm:$0xff]
    %v170 = vld [vmem:[#allocation5 + $0x58] sm:$0xff]
    %v171 = vld [vmem:[#allocation5 + $0x60] sm:$0xff]
    %v172 = vld [vmem:[#allocation5 + $0x68] sm:$0xff]
    %v173 = vld [vmem:[#allocation5 + $0x70] sm:$0xff]
    %v174 = vld [vmem:[#allocation5 + $0x78] sm:$0xff]
    %v175 = vld [vmem:[#allocation5 + $0x80] sm:$0xff]
    %v176 = vld [vmem:[#allocation5 + $0x88] sm:$0xff]
    %v177 = vld [vmem:[#allocation5 + $0x90] sm:$0xff]
    %v178 = vld [vmem:[#allocation5 + $0x98] sm:$0xff]
    %v179 = vld [vmem:[#allocation5 + $0xa0] sm:$0xff]
    %v180 = vld [vmem:[#allocation5 + $0xa8] sm:$0xff]
    %v181 = vld [vmem:[#allocation5 + $0xb0] sm:$0xff]
    %v182 = vld [vmem:[#allocation5 + $0xb8] sm:$0xff]
    %v183 = vld [vmem:[#allocation5 + $0xc0] sm:$0xff]
    %v184 = vld [vmem:[#allocation5 + $0xc8] sm:$0xff]
    %v185 = vld [vmem:[#allocation5 + $0xd0] sm:$0xff]
    %v186 = vld [vmem:[#allocation5 + $0xd8] sm:$0xff]
    %v187 = vld [vmem:[#allocation5 + $0xe0] sm:$0xff]
    %v188 = vld [vmem:[#allocation5 + $0xe8] sm:$0xff]
    %v189 = vld [vmem:[#allocation5 + $0xf0] sm:$0xff]
    %v190 = vld [vmem:[#allocation5 + $0xf8] sm:$0xff]
    %v191 = vld [vmem:[#allocation5 + $0x100] sm:$0xff]
    %v192 = vld [vmem:[#allocation5 + $0x108] sm:$0xff]
    %v193 = vld [vmem:[#allocation5 + $0x110] sm:$0xff]
    %v194 = vld [vmem:[#allocation5 + $0x118] sm:$0xff]
    %v195 = vld [vmem:[#allocation5 + $0x120] sm:$0xff]
    %v196 = vld [vmem:[#allocation5 + $0x128] sm:$0xff]
    %v197 = vld [vmem:[#allocation5 + $0x130] sm:$0xff]
    %v198 = vld [vmem:[#allocation5 + $0x138] sm:$0xff]
    %v199 = vld [vmem:[#allocation5 + $0x140] sm:$0xff]
    %v200 = vld [vmem:[#allocation5 + $0x148] sm:$0xff]
    %v201 = vld [vmem:[#allocation5 + $0x150] sm:$0xff]
    %v202 = vld [vmem:[#allocation5 + $0x158] sm:$0xff]
    %v203 = vld [vmem:[#allocation5 + $0x160] sm:$0xff]
    %v204 = vld [vmem:[#allocation5 + $0x168] sm:$0xff]
    %v205 = vld [vmem:[#allocation5 + $0x170] sm:$0xff]
    %v206 = vld [vmem:[#allocation5 + $0x178] sm:$0xff]
    %v207 = vld [vmem:[#allocation5 + $0x180] sm:$0xff]
    %v208 = vld [vmem:[#allocation5 + $0x188] sm:$0xff]
    %v209 = vld [vmem:[#allocation5 + $0x190] sm:$0xff]
    %v210 = vld [vmem:[#allocation5 + $0x198] sm:$0xff]
    %v211 = vld [vmem:[#allocation5 + $0x1a0] sm:$0xff]
    %v212 = vld [vmem:[#allocation5 + $0x1a8] sm:$0xff]
    %v213 = vld [vmem:[#allocation5 + $0x1b0] sm:$0xff]
    %v214 = vld [vmem:[#allocation5 + $0x1b8] sm:$0xff]
    %v215 = vld [vmem:[#allocation5 + $0x1c0] sm:$0xff]
    %v216 = vld [vmem:[#allocation5 + $0x1c8] sm:$0xff]
    %v217 = vld [vmem:[#allocation5 + $0x1d0] sm:$0xff]
    %v218 = vld [vmem:[#allocation5 + $0x1d8] sm:$0xff]
    %v219 = vld [vmem:[#allocation5 + $0x1e0] sm:$0xff]
    %v220 = vld [vmem:[#allocation5 + $0x1e8] sm:$0xff]
    %v221 = vld [vmem:[#allocation5 + $0x1f0] sm:$0xff]
    %v222 = vld [vmem:[#allocation5 + $0x1f8] sm:$0xff]
    %v223 = vld [vmem:[#allocation5 + $0x200] sm:$0xff]
    %v224 = vld [vmem:[#allocation5 + $0x208] sm:$0xff]
    %v225 = vld [vmem:[#allocation5 + $0x210] sm:$0xff]
    %v226 = vld [vmem:[#allocation5 + $0x218] sm:$0xff]
    %v227 = vld [vmem:[#allocation5 + $0x220] sm:$0xff]
    %v228 = vld [vmem:[#allocation5 + $0x228] sm:$0xff]
    %v229 = vld [vmem:[#allocation5 + $0x230] sm:$0xff]
    %v230 = vld [vmem:[#allocation5 + $0x238] sm:$0xff]
    %v231 = vld [vmem:[#allocation5 + $0x240] sm:$0xff]
    %v232 = vld [vmem:[#allocation5 + $0x248] sm:$0xff]
    %v233 = vld [vmem:[#allocation5 + $0x250] sm:$0xff]
    %v234 = vld [vmem:[#allocation5 + $0x258] sm:$0xff]
    %v235 = vld [vmem:[#allocation5 + $0x260] sm:$0xff]
    %v236 = vld [vmem:[#allocation5 + $0x268] sm:$0xff]
    %v237 = vld [vmem:[#allocation5 + $0x270] sm:$0xff]
    %v238 = vld [vmem:[#allocation5 + $0x278] sm:$0xff]
    %v239 = vld [vmem:[#allocation5 + $0x280] sm:$0xff]
    %v240 = vld [vmem:[#allocation5 + $0x288] sm:$0xff]
    %v241 = vld [vmem:[#allocation5 + $0x290] sm:$0xff]
    %v242 = vld [vmem:[#allocation5 + $0x298] sm:$0xff]
    %v243 = vld [vmem:[#allocation5 + $0x2a0] sm:$0xff]
    %v244 = vld [vmem:[#allocation5 + $0x2a8] sm:$0xff]
    %v245 = vld [vmem:[#allocation5 + $0x2b0] sm:$0xff]
    %v246 = vld [vmem:[#allocation5 + $0x2b8] sm:$0xff]
    %v247 = vld [vmem:[#allocation5 + $0x2c0] sm:$0xff]
    %v248 = vld [vmem:[#allocation5 + $0x2c8] sm:$0xff]
    %v249 = vld [vmem:[#allocation5 + $0x2d0] sm:$0xff]
    %v250 = vld [vmem:[#allocation5 + $0x2d8] sm:$0xff]
    %v251 = vld [vmem:[#allocation5 + $0x2e0] sm:$0xff]
    %v252 = vld [vmem:[#allocation5 + $0x2e8] sm:$0xff]
    %v253 = vld [vmem:[#allocation5 + $0x2f0] sm:$0xff]
    %v254 = vld [vmem:[#allocation5 + $0x2f8] sm:$0xff]
    %v255 = vadd.f32 %v63, %v159
    %v256 = vadd.f32 %v64, %v160
    %v257 = vadd.f32 %v65, %v161
    %v258 = vadd.f32 %v66, %v162
    %v259 = vadd.f32 %v67, %v163
    %v260 = vadd.f32 %v68, %v164
    %v261 = vadd.f32 %v69, %v165
    %v262 = vadd.f32 %v70, %v166
    %v263 = vadd.f32 %v71, %v167
    %v264 = vadd.f32 %v72, %v168
    %v265 = vadd.f32 %v73, %v169
    %v266 = vadd.f32 %v74, %v170
    %v267 = vadd.f32 %v75, %v171
    %v268 = vadd.f32 %v76, %v172
    %v269 = vadd.f32 %v77, %v173
    %v270 = vadd.f32 %v78, %v174
    %v271 = vadd.f32 %v79, %v175
    %v272 = vadd.f32 %v80, %v176
    %v273 = vadd.f32 %v81, %v177
    %v274 = vadd.f32 %v82, %v178
    %v275 = vadd.f32 %v83, %v179
    %v276 = vadd.f32 %v84, %v180
    %v277 = vadd.f32 %v85, %v181
    %v278 = vadd.f32 %v86, %v182
    %v279 = vadd.f32 %v87, %v183
    %v280 = vadd.f32 %v88, %v184
    %v281 = vadd.f32 %v89, %v185
    %v282 = vadd.f32 %v90, %v186
    %v283 = vadd.f32 %v91, %v187
    %v284 = vadd.f32 %v92, %v188
    %v285 = vadd.f32 %v93, %v189
    %v286 = vadd.f32 %v94, %v190
    %v287 = vadd.f32 %v95, %v191
    %v288 = vadd.f32 %v96, %v192
    %v289 = vadd.f32 %v97, %v193
    %v290 = vadd.f32 %v98, %v194
    %v291 = vadd.f32 %v99, %v195
    %v292 = vadd.f32 %v100, %v196
    %v293 = vadd.f32 %v101, %v197
    %v294 = vadd.f32 %v102, %v198
    %v295 = vadd.f32 %v103, %v199
    %v296 = vadd.f32 %v104, %v200
    %v297 = vadd.f32 %v105, %v201
    %v298 = vadd.f32 %v106, %v202
    %v299 = vadd.f32 %v107, %v203
    %v300 = vadd.f32 %v108, %v204
    %v301 = vadd.f32 %v109, %v205
    %v302 = vadd.f32 %v110, %v206
    %v303 = vadd.f32 %v111, %v207
    %v304 = vadd.f32 %v112, %v208
    %v305 = vadd.f32 %v113, %v209
    %v306 = vadd.f32 %v114, %v210
    %v307 = vadd.f32 %v115, %v211
    %v308 = vadd.f32 %v116, %v212
    %v309 = vadd.f32 %v117, %v213
    %v310 = vadd.f32 %v118, %v214
    %v311 = vadd.f32 %v119, %v215
    %v312 = vadd.f32 %v120, %v216
    %v313 = vadd.f32 %v121, %v217
    %v314 = vadd.f32 %v122, %v218
    %v315 = vadd.f32 %v123, %v219
    %v316 = vadd.f32 %v124, %v220
    %v317 = vadd.f32 %v125, %v221
    %v318 = vadd.f32 %v126, %v222
    %v319 = vadd.f32 %v127, %v223
    %v320 = vadd.f32 %v128, %v224
    %v321 = vadd.f32 %v129, %v225
    %v322 = vadd.f32 %v130, %v226
    %v323 = vadd.f32 %v131, %v227
    %v324 = vadd.f32 %v132, %v228
    %v325 = vadd.f32 %v133, %v229
    %v326 = vadd.f32 %v134, %v230
    %v327 = vadd.f32 %v135, %v231
    %v328 = vadd.f32 %v136, %v232
    %v329 = vadd.f32 %v137, %v233
    %v330 = vadd.f32 %v138, %v234
    %v331 = vadd.f32 %v139, %v235
    %v332 = vadd.f32 %v140, %v236
    %v333 = vadd.f32 %v141, %v237
    %v334 = vadd.f32 %v142, %v238
    %v335 = vadd.f32 %v143, %v239
    %v336 = vadd.f32 %v144, %v240
    %v337 = vadd.f32 %v145, %v241
    %v338 = vadd.f32 %v146, %v242
    %v339 = vadd.f32 %v147, %v243
    %v340 = vadd.f32 %v148, %v244
    %v341 = vadd.f32 %v149, %v245
    %v342 = vadd.f32 %v150, %v246
    %v343 = vadd.f32 %v151, %v247
    %v344 = vadd.f32 %v152, %v248
    %v345 = vadd.f32 %v153, %v249
    %v346 = vadd.f32 %v154, %v250
    %v347 = vadd.f32 %v155, %v251
    %v348 = vadd.f32 %v156, %v252
    %v349 = vadd.f32 %v157, %v253
    %v350 = vadd.f32 %v158, %v254
    %v351 = vadd.f32 %v255, %v256
    %352 = vadd.xlane.f32.xlu0 %v351
    %v353 = vpop.xlane.xlu0 %352
    %v354 = vadd.f32 %v257, %v258
    %355 = vadd.xlane.f32.xlu0 %v354
    %v356 = vpop.xlane.xlu0 %355
    %v357 = vadd.f32 %v259, %v260
    %358 = vadd.xlane.f32.xlu0 %v357
    %v359 = vpop.xlane.xlu0 %358
    %v360 = vadd.f32 %v261, %v262
    %361 = vadd.xlane.f32.xlu0 %v360
    %v362 = vpop.xlane.xlu0 %361
    %v363 = vadd.f32 %v263, %v264
    %364 = vadd.xlane.f32.xlu0 %v363
    %v365 = vpop.xlane.xlu0 %364
    %v366 = vadd.f32 %v265, %v266
    %367 = vadd.xlane.f32.xlu0 %v366
    %v368 = vpop.xlane.xlu0 %367
    %v369 = vadd.f32 %v267, %v268
    %370 = vadd.xlane.f32.xlu0 %v369
    %v371 = vpop.xlane.xlu0 %370
    %v372 = vadd.f32 %v269, %v270
    %373 = vadd.xlane.f32.xlu0 %v372
    %v374 = vpop.xlane.xlu0 %373
    %v375 = vadd.f32 %v271, %v272
    %376 = vadd.xlane.f32.xlu0 %v375
    %v377 = vpop.xlane.xlu0 %376
    %v378 = vadd.f32 %v273, %v274
    %379 = vadd.xlane.f32.xlu0 %v378
    %v380 = vpop.xlane.xlu0 %379
    %v381 = vadd.f32 %v275, %v276
    %382 = vadd.xlane.f32.xlu0 %v381
    %v383 = vpop.xlane.xlu0 %382
    %v384 = vadd.f32 %v277, %v278
    %385 = vadd.xlane.f32.xlu0 %v384
    %v386 = vpop.xlane.xlu0 %385
    %v387 = vadd.f32 %v279, %v280
    %388 = vadd.xlane.f32.xlu0 %v387
    %v389 = vpop.xlane.xlu0 %388
    %v390 = vadd.f32 %v281, %v282
    %391 = vadd.xlane.f32.xlu0 %v390
    %v392 = vpop.xlane.xlu0 %391
    %v393 = vadd.f32 %v283, %v284
    %394 = vadd.xlane.f32.xlu0 %v393
    %v395 = vpop.xlane.xlu0 %394
    %v396 = vadd.f32 %v285, %v286
    %397 = vadd.xlane.f32.xlu0 %v396
    %v398 = vpop.xlane.xlu0 %397
    %v399 = vadd.f32 %v287, %v288
    %400 = vadd.xlane.f32.xlu0 %v399
    %v401 = vpop.xlane.xlu0 %400
    %v402 = vadd.f32 %v289, %v290
    %403 = vadd.xlane.f32.xlu0 %v402
    %v404 = vpop.xlane.xlu0 %403
    %v405 = vadd.f32 %v291, %v292
    %406 = vadd.xlane.f32.xlu0 %v405
    %v407 = vpop.xlane.xlu0 %406
    %v408 = vadd.f32 %v293, %v294
    %409 = vadd.xlane.f32.xlu0 %v408
    %v410 = vpop.xlane.xlu0 %409
    %v411 = vadd.f32 %v295, %v296
    %412 = vadd.xlane.f32.xlu0 %v411
    %v413 = vpop.xlane.xlu0 %412
    %v414 = vadd.f32 %v297, %v298
    %415 = vadd.xlane.f32.xlu0 %v414
    %v416 = vpop.xlane.xlu0 %415
    %v417 = vadd.f32 %v299, %v300
    %418 = vadd.xlane.f32.xlu0 %v417
    %v419 = vpop.xlane.xlu0 %418
    %v420 = vadd.f32 %v301, %v302
    %421 = vadd.xlane.f32.xlu0 %v420
    %v422 = vpop.xlane.xlu0 %421
    %v423 = vadd.f32 %v303, %v304
    %424 = vadd.xlane.f32.xlu0 %v423
    %v425 = vpop.xlane.xlu0 %424
    %v426 = vadd.f32 %v305, %v306
    %427 = vadd.xlane.f32.xlu0 %v426
    %v428 = vpop.xlane.xlu0 %427
    %v429 = vadd.f32 %v307, %v308
    %430 = vadd.xlane.f32.xlu0 %v429
    %v431 = vpop.xlane.xlu0 %430
    %v432 = vadd.f32 %v309, %v310
    %433 = vadd.xlane.f32.xlu0 %v432
    %v434 = vpop.xlane.xlu0 %433
    %v435 = vadd.f32 %v311, %v312
    %436 = vadd.xlane.f32.xlu0 %v435
    %v437 = vpop.xlane.xlu0 %436
    %v438 = vadd.f32 %v313, %v314
    %439 = vadd.xlane.f32.xlu0 %v438
    %v440 = vpop.xlane.xlu0 %439
    %v441 = vadd.f32 %v315, %v316
    %442 = vadd.xlane.f32.xlu0 %v441
    %v443 = vpop.xlane.xlu0 %442
    %v444 = vadd.f32 %v317, %v318
    %445 = vadd.xlane.f32.xlu0 %v444
    %v446 = vpop.xlane.xlu0 %445
    %v447 = vadd.f32 %v319, %v320
    %448 = vadd.xlane.f32.xlu0 %v447
    %v449 = vpop.xlane.xlu0 %448
    %v450 = vadd.f32 %v321, %v322
    %451 = vadd.xlane.f32.xlu0 %v450
    %v452 = vpop.xlane.xlu0 %451
    %v453 = vadd.f32 %v323, %v324
    %454 = vadd.xlane.f32.xlu0 %v453
    %v455 = vpop.xlane.xlu0 %454
    %v456 = vadd.f32 %v325, %v326
    %457 = vadd.xlane.f32.xlu0 %v456
    %v458 = vpop.xlane.xlu0 %457
    %v459 = vadd.f32 %v327, %v328
    %460 = vadd.xlane.f32.xlu0 %v459
    %v461 = vpop.xlane.xlu0 %460
    %v462 = vadd.f32 %v329, %v330
    %463 = vadd.xlane.f32.xlu0 %v462
    %v464 = vpop.xlane.xlu0 %463
    %v465 = vadd.f32 %v331, %v332
    %466 = vadd.xlane.f32.xlu0 %v465
    %v467 = vpop.xlane.xlu0 %466
    %v468 = vadd.f32 %v333, %v334
    %469 = vadd.xlane.f32.xlu0 %v468
    %v470 = vpop.xlane.xlu0 %469
    %v471 = vadd.f32 %v335, %v336
    %472 = vadd.xlane.f32.xlu0 %v471
    %v473 = vpop.xlane.xlu0 %472
    %v474 = vadd.f32 %v337, %v338
    %475 = vadd.xlane.f32.xlu0 %v474
    %v476 = vpop.xlane.xlu0 %475
    %v477 = vadd.f32 %v339, %v340
    %478 = vadd.xlane.f32.xlu0 %v477
    %v479 = vpop.xlane.xlu0 %478
    %v480 = vadd.f32 %v341, %v342
    %481 = vadd.xlane.f32.xlu0 %v480
    %v482 = vpop.xlane.xlu0 %481
    %v483 = vadd.f32 %v343, %v344
    %484 = vadd.xlane.f32.xlu0 %v483
    %v485 = vpop.xlane.xlu0 %484
    %v486 = vadd.f32 %v345, %v346
    %487 = vadd.xlane.f32.xlu0 %v486
    %v488 = vpop.xlane.xlu0 %487
    %v489 = vadd.f32 %v347, %v348
    %490 = vadd.xlane.f32.xlu0 %v489
    %v491 = vpop.xlane.xlu0 %490
    %v492 = vadd.f32 %v349, %v350
    %493 = vadd.xlane.f32.xlu0 %v492
    %v494 = vpop.xlane.xlu0 %493
    %v495 = vrcp.pop 256.0
    %v496 = vmul.f32 256.0, %v495
    %v497 = vsub.f32 1.0, %v496
    %v498 = vmul.f32 %v495, %v497
    %v499 = vadd.f32 %v495, %v498
    %vm500 = vweird.f32 %v495
    %v501 = vsel %vm500, %v495, %v499
    %v502 = vmul.f32 %v353, %v501
    %v503 = vmul.f32 %v356, %v501
    %v504 = vmul.f32 %v359, %v501
    %v505 = vmul.f32 %v362, %v501
    %v506 = vmul.f32 %v365, %v501
    %v507 = vmul.f32 %v368, %v501
    %v508 = vmul.f32 %v371, %v501
    %v509 = vmul.f32 %v374, %v501
    %v510 = vmul.f32 %v377, %v501
    %v511 = vmul.f32 %v380, %v501
    %v512 = vmul.f32 %v383, %v501
    %v513 = vmul.f32 %v386, %v501
    %v514 = vmul.f32 %v389, %v501
    %v515 = vmul.f32 %v392, %v501
    %v516 = vmul.f32 %v395, %v501
    %v517 = vmul.f32 %v398, %v501
    %v518 = vmul.f32 %v401, %v501
    %v519 = vmul.f32 %v404, %v501
    %v520 = vmul.f32 %v407, %v501
    %v521 = vmul.f32 %v410, %v501
    %v522 = vmul.f32 %v413, %v501
    %v523 = vmul.f32 %v416, %v501
    %v524 = vmul.f32 %v419, %v501
    %v525 = vmul.f32 %v422, %v501
    %v526 = vmul.f32 %v425, %v501
    %v527 = vmul.f32 %v428, %v501
    %v528 = vmul.f32 %v431, %v501
    %v529 = vmul.f32 %v434, %v501
    %v530 = vmul.f32 %v437, %v501
    %v531 = vmul.f32 %v440, %v501
    %v532 = vmul.f32 %v443, %v501
    %v533 = vmul.f32 %v446, %v501
    %v534 = vmul.f32 %v449, %v501
    %v535 = vmul.f32 %v452, %v501
    %v536 = vmul.f32 %v455, %v501
    %v537 = vmul.f32 %v458, %v501
    %v538 = vmul.f32 %v461, %v501
    %v539 = vmul.f32 %v464, %v501
    %v540 = vmul.f32 %v467, %v501
    %v541 = vmul.f32 %v470, %v501
    %v542 = vmul.f32 %v473, %v501
    %v543 = vmul.f32 %v476, %v501
    %v544 = vmul.f32 %v479, %v501
    %v545 = vmul.f32 %v482, %v501
    %v546 = vmul.f32 %v485, %v501
    %v547 = vmul.f32 %v488, %v501
    %v548 = vmul.f32 %v491, %v501
    %v549 = vmul.f32 %v494, %v501
    %v550 = vsub.f32 %v255, %v502
    %v551 = vsub.f32 %v256, %v502
    %v552 = vsub.f32 %v257, %v503
    %v553 = vsub.f32 %v258, %v503
    %v554 = vsub.f32 %v259, %v504
    %v555 = vsub.f32 %v260, %v504
    %v556 = vsub.f32 %v261, %v505
    %v557 = vsub.f32 %v262, %v505
    %v558 = vsub.f32 %v263, %v506
    %v559 = vsub.f32 %v264, %v506
    %v560 = vsub.f32 %v265, %v507
    %v561 = vsub.f32 %v266, %v507
    %v562 = vsub.f32 %v267, %v508
    %v563 = vsub.f32 %v268, %v508
    %v564 = vsub.f32 %v269, %v509
    %v565 = vsub.f32 %v270, %v509
    %v566 = vsub.f32 %v271, %v510
    %v567 = vsub.f32 %v272, %v510
    %v568 = vsub.f32 %v273, %v511
    %v569 = vsub.f32 %v274, %v511
    %v570 = vsub.f32 %v275, %v512
    %v571 = vsub.f32 %v276, %v512
    %v572 = vsub.f32 %v277, %v513
    %v573 = vsub.f32 %v278, %v513
    %v574 = vsub.f32 %v279, %v514
    %v575 = vsub.f32 %v280, %v514
    %v576 = vsub.f32 %v281, %v515
    %v577 = vsub.f32 %v282, %v515
    %v578 = vsub.f32 %v283, %v516
    %v579 = vsub.f32 %v284, %v516
    %v580 = vsub.f32 %v285, %v517
    %v581 = vsub.f32 %v286, %v517
    %v582 = vsub.f32 %v287, %v518
    %v583 = vsub.f32 %v288, %v518
    %v584 = vsub.f32 %v289, %v519
    %v585 = vsub.f32 %v290, %v519
    %v586 = vsub.f32 %v291, %v520
    %v587 = vsub.f32 %v292, %v520
    %v588 = vsub.f32 %v293, %v521
    %v589 = vsub.f32 %v294, %v521
    %v590 = vsub.f32 %v295, %v522
    %v591 = vsub.f32 %v296, %v522
    %v592 = vsub.f32 %v297, %v523
    %v593 = vsub.f32 %v298, %v523
    %v594 = vsub.f32 %v299, %v524
    %v595 = vsub.f32 %v300, %v524
    %v596 = vsub.f32 %v301, %v525
    %v597 = vsub.f32 %v302, %v525
    %v598 = vsub.f32 %v303, %v526
    %v599 = vsub.f32 %v304, %v526
    %v600 = vsub.f32 %v305, %v527
    %v601 = vsub.f32 %v306, %v527
    %v602 = vsub.f32 %v307, %v528
    %v603 = vsub.f32 %v308, %v528
    %v604 = vsub.f32 %v309, %v529
    %v605 = vsub.f32 %v310, %v529
    %v606 = vsub.f32 %v311, %v530
    %v607 = vsub.f32 %v312, %v530
    %v608 = vsub.f32 %v313, %v531
    %v609 = vsub.f32 %v314, %v531
    %v610 = vsub.f32 %v315, %v532
    %v611 = vsub.f32 %v316, %v532
    %v612 = vsub.f32 %v317, %v533
    %v613 = vsub.f32 %v318, %v533
    %v614 = vsub.f32 %v319, %v534
    %v615 = vsub.f32 %v320, %v534
    %v616 = vsub.f32 %v321, %v535
    %v617 = vsub.f32 %v322, %v535
    %v618 = vsub.f32 %v323, %v536
    %v619 = vsub.f32 %v324, %v536
    %v620 = vsub.f32 %v325, %v537
    %v621 = vsub.f32 %v326, %v537
    %v622 = vsub.f32 %v327, %v538
    %v623 = vsub.f32 %v328, %v538
    %v624 = vsub.f32 %v329, %v539
    %v625 = vsub.f32 %v330, %v539
    %v626 = vsub.f32 %v331, %v540
    %v627 = vsub.f32 %v332, %v540
    %v628 = vsub.f32 %v333, %v541
    %v629 = vsub.f32 %v334, %v541
    %v630 = vsub.f32 %v335, %v542
    %v631 = vsub.f32 %v336, %v542
    %v632 = vsub.f32 %v337, %v543
    %v633 = vsub.f32 %v338, %v543
    %v634 = vsub.f32 %v339, %v544
    %v635 = vsub.f32 %v340, %v544
    %v636 = vsub.f32 %v341, %v545
    %v637 = vsub.f32 %v342, %v545
    %v638 = vsub.f32 %v343, %v546
    %v639 = vsub.f32 %v344, %v546
    %v640 = vsub.f32 %v345, %v547
    %v641 = vsub.f32 %v346, %v547
    %v642 = vsub.f32 %v347, %v548
    %v643 = vsub.f32 %v348, %v548
    %v644 = vsub.f32 %v349, %v549
    %v645 = vsub.f32 %v350, %v549
    %v646 = vmul.f32 %v550, %v550
    %v647 = vmul.f32 %v551, %v551
    %v648 = vmul.f32 %v552, %v552
    %v649 = vmul.f32 %v553, %v553
    %v650 = vmul.f32 %v554, %v554
    %v651 = vmul.f32 %v555, %v555
    %v652 = vmul.f32 %v556, %v556
    %v653 = vmul.f32 %v557, %v557
    %v654 = vmul.f32 %v558, %v558
    %v655 = vmul.f32 %v559, %v559
    %v656 = vmul.f32 %v560, %v560
    %v657 = vmul.f32 %v561, %v561
    %v658 = vmul.f32 %v562, %v562
    %v659 = vmul.f32 %v563, %v563
    %v660 = vmul.f32 %v564, %v564
    %v661 = vmul.f32 %v565, %v565
    %v662 = vmul.f32 %v566, %v566
    %v663 = vmul.f32 %v567, %v567
    %v664 = vmul.f32 %v568, %v568
    %v665 = vmul.f32 %v569, %v569
    %v666 = vmul.f32 %v570, %v570
    %v667 = vmul.f32 %v571, %v571
    %v668 = vmul.f32 %v572, %v572
    %v669 = vmul.f32 %v573, %v573
    %v670 = vmul.f32 %v574, %v574
    %v671 = vmul.f32 %v575, %v575
    %v672 = vmul.f32 %v576, %v576
    %v673 = vmul.f32 %v577, %v577
    %v674 = vmul.f32 %v578, %v578
    %v675 = vmul.f32 %v579, %v579
    %v676 = vmul.f32 %v580, %v580
    %v677 = vmul.f32 %v581, %v581
    %v678 = vmul.f32 %v582, %v582
    %v679 = vmul.f32 %v583, %v583
    %v680 = vmul.f32 %v584, %v584
    %v681 = vmul.f32 %v585, %v585
    %v682 = vmul.f32 %v586, %v586
    %v683 = vmul.f32 %v587, %v587
    %v684 = vmul.f32 %v588, %v588
    %v685 = vmul.f32 %v589, %v589
    %v686 = vmul.f32 %v590, %v590
    %v687 = vmul.f32 %v591, %v591
    %v688 = vmul.f32 %v592, %v592
    %v689 = vmul.f32 %v593, %v593
    %v690 = vmul.f32 %v594, %v594
    %v691 = vmul.f32 %v595, %v595
    %v692 = vmul.f32 %v596, %v596
    %v693 = vmul.f32 %v597, %v597
    %v694 = vmul.f32 %v598, %v598
    %v695 = vmul.f32 %v599, %v599
    %v696 = vmul.f32 %v600, %v600
    %v697 = vmul.f32 %v601, %v601
    %v698 = vmul.f32 %v602, %v602
    %v699 = vmul.f32 %v603, %v603
    %v700 = vmul.f32 %v604, %v604
    %v701 = vmul.f32 %v605, %v605
    %v702 = vmul.f32 %v606, %v606
    %v703 = vmul.f32 %v607, %v607
    %v704 = vmul.f32 %v608, %v608
    %v705 = vmul.f32 %v609, %v609
    %v706 = vmul.f32 %v610, %v610
    %v707 = vmul.f32 %v611, %v611
    %v708 = vmul.f32 %v612, %v612
    %v709 = vmul.f32 %v613, %v613
    %v710 = vmul.f32 %v614, %v614
    %v711 = vmul.f32 %v615, %v615
    %v712 = vmul.f32 %v616, %v616
    %v713 = vmul.f32 %v617, %v617
    %v714 = vmul.f32 %v618, %v618
    %v715 = vmul.f32 %v619, %v619
    %v716 = vmul.f32 %v620, %v620
    %v717 = vmul.f32 %v621, %v621
    %v718 = vmul.f32 %v622, %v622
    %v719 = vmul.f32 %v623, %v623
    %v720 = vmul.f32 %v624, %v624
    %v721 = vmul.f32 %v625, %v625
    %v722 = vmul.f32 %v626, %v626
    %v723 = vmul.f32 %v627, %v627
    %v724 = vmul.f32 %v628, %v628
    %v725 = vmul.f32 %v629, %v629
    %v726 = vmul.f32 %v630, %v630
    %v727 = vmul.f32 %v631, %v631
    %v728 = vmul.f32 %v632, %v632
    %v729 = vmul.f32 %v633, %v633
    %v730 = vmul.f32 %v634, %v634
    %v731 = vmul.f32 %v635, %v635
    %v732 = vmul.f32 %v636, %v636
    %v733 = vmul.f32 %v637, %v637
    %v734 = vmul.f32 %v638, %v638
    %v735 = vmul.f32 %v639, %v639
    %v736 = vmul.f32 %v640, %v640
    %v737 = vmul.f32 %v641, %v641
    %v738 = vmul.f32 %v642, %v642
    %v739 = vmul.f32 %v643, %v643
    %v740 = vmul.f32 %v644, %v644
    %v741 = vmul.f32 %v645, %v645
    %v742 = vadd.f32 %v646, %v647
    %743 = vadd.xlane.f32.xlu0 %v742
    %v744 = vpop.xlane.xlu0 %743
    %v745 = vadd.f32 %v648, %v649
    %746 = vadd.xlane.f32.xlu0 %v745
    %v747 = vpop.xlane.xlu0 %746
    %v748 = vadd.f32 %v650, %v651
    %749 = vadd.xlane.f32.xlu0 %v748
    %v750 = vpop.xlane.xlu0 %749
    %v751 = vadd.f32 %v652, %v653
    %752 = vadd.xlane.f32.xlu0 %v751
    %v753 = vpop.xlane.xlu0 %752
    %v754 = vadd.f32 %v654, %v655
    %755 = vadd.xlane.f32.xlu0 %v754
    %v756 = vpop.xlane.xlu0 %755
    %v757 = vadd.f32 %v656, %v657
    %758 = vadd.xlane.f32.xlu0 %v757
    %v759 = vpop.xlane.xlu0 %758
    %v760 = vadd.f32 %v658, %v659
    %761 = vadd.xlane.f32.xlu0 %v760
    %v762 = vpop.xlane.xlu0 %761
    %v763 = vadd.f32 %v660, %v661
    %764 = vadd.xlane.f32.xlu0 %v763
    %v765 = vpop.xlane.xlu0 %764
    %v766 = vadd.f32 %v662, %v663
    %767 = vadd.xlane.f32.xlu0 %v766
    %v768 = vpop.xlane.xlu0 %767
    %v769 = vadd.f32 %v664, %v665
    %770 = vadd.xlane.f32.xlu0 %v769
    %v771 = vpop.xlane.xlu0 %770
    %v772 = vadd.f32 %v666, %v667
    %773 = vadd.xlane.f32.xlu0 %v772
    %v774 = vpop.xlane.xlu0 %773
    %v775 = vadd.f32 %v668, %v669
    %776 = vadd.xlane.f32.xlu0 %v775
    %v777 = vpop.xlane.xlu0 %776
    %v778 = vadd.f32 %v670, %v671
    %779 = vadd.xlane.f32.xlu0 %v778
    %v780 = vpop.xlane.xlu0 %779
    %v781 = vadd.f32 %v672, %v673
    %782 = vadd.xlane.f32.xlu0 %v781
    %v783 = vpop.xlane.xlu0 %782
    %v784 = vadd.f32 %v674, %v675
    %785 = vadd.xlane.f32.xlu0 %v784
    %v786 = vpop.xlane.xlu0 %785
    %v787 = vadd.f32 %v676, %v677
    %788 = vadd.xlane.f32.xlu0 %v787
    %v789 = vpop.xlane.xlu0 %788
    %v790 = vadd.f32 %v678, %v679
    %791 = vadd.xlane.f32.xlu0 %v790
    %v792 = vpop.xlane.xlu0 %791
    %v793 = vadd.f32 %v680, %v681
    %794 = vadd.xlane.f32.xlu0 %v793
    %v795 = vpop.xlane.xlu0 %794
    %v796 = vadd.f32 %v682, %v683
    %797 = vadd.xlane.f32.xlu0 %v796
    %v798 = vpop.xlane.xlu0 %797
    %v799 = vadd.f32 %v684, %v685
    %800 = vadd.xlane.f32.xlu0 %v799
    %v801 = vpop.xlane.xlu0 %800
    %v802 = vadd.f32 %v686, %v687
    %803 = vadd.xlane.f32.xlu0 %v802
    %v804 = vpop.xlane.xlu0 %803
    %v805 = vadd.f32 %v688, %v689
    %806 = vadd.xlane.f32.xlu0 %v805
    %v807 = vpop.xlane.xlu0 %806
    %v808 = vadd.f32 %v690, %v691
    %809 = vadd.xlane.f32.xlu0 %v808
    %v810 = vpop.xlane.xlu0 %809
    %v811 = vadd.f32 %v692, %v693
    %812 = vadd.xlane.f32.xlu0 %v811
    %v813 = vpop.xlane.xlu0 %812
    %v814 = vadd.f32 %v694, %v695
    %815 = vadd.xlane.f32.xlu0 %v814
    %v816 = vpop.xlane.xlu0 %815
    %v817 = vadd.f32 %v696, %v697
    %818 = vadd.xlane.f32.xlu0 %v817
    %v819 = vpop.xlane.xlu0 %818
    %v820 = vadd.f32 %v698, %v699
    %821 = vadd.xlane.f32.xlu0 %v820
    %v822 = vpop.xlane.xlu0 %821
    %v823 = vadd.f32 %v700, %v701
    %824 = vadd.xlane.f32.xlu0 %v823
    %v825 = vpop.xlane.xlu0 %824
    %v826 = vadd.f32 %v702, %v703
    %827 = vadd.xlane.f32.xlu0 %v826
    %v828 = vpop.xlane.xlu0 %827
    %v829 = vadd.f32 %v704, %v705
    %830 = vadd.xlane.f32.xlu0 %v829
    %v831 = vpop.xlane.xlu0 %830
    %v832 = vadd.f32 %v706, %v707
    %833 = vadd.xlane.f32.xlu0 %v832
    %v834 = vpop.xlane.xlu0 %833
    %v835 = vadd.f32 %v708, %v709
    %836 = vadd.xlane.f32.xlu0 %v835
    %v837 = vpop.xlane.xlu0 %836
    %v838 = vadd.f32 %v710, %v711
    %839 = vadd.xlane.f32.xlu0 %v838
    %v840 = vpop.xlane.xlu0 %839
    %v841 = vadd.f32 %v712, %v713
    %842 = vadd.xlane.f32.xlu0 %v841
    %v843 = vpop.xlane.xlu0 %842
    %v844 = vadd.f32 %v714, %v715
    %845 = vadd.xlane.f32.xlu0 %v844
    %v846 = vpop.xlane.xlu0 %845
    %v847 = vadd.f32 %v716, %v717
    %848 = vadd.xlane.f32.xlu0 %v847
    %v849 = vpop.xlane.xlu0 %848
    %v850 = vadd.f32 %v718, %v719
    %851 = vadd.xlane.f32.xlu0 %v850
    %v852 = vpop.xlane.xlu0 %851
    %v853 = vadd.f32 %v720, %v721
    %854 = vadd.xlane.f32.xlu0 %v853
    %v855 = vpop.xlane.xlu0 %854
    %v856 = vadd.f32 %v722, %v723
    %857 = vadd.xlane.f32.xlu0 %v856
    %v858 = vpop.xlane.xlu0 %857
    %v859 = vadd.f32 %v724, %v725
    %860 = vadd.xlane.f32.xlu0 %v859
    %v861 = vpop.xlane.xlu0 %860
    %v862 = vadd.f32 %v726, %v727
    %863 = vadd.xlane.f32.xlu0 %v862
    %v864 = vpop.xlane.xlu0 %863
    %v865 = vadd.f32 %v728, %v729
    %866 = vadd.xlane.f32.xlu0 %v865
    %v867 = vpop.xlane.xlu0 %866
    %v868 = vadd.f32 %v730, %v731
    %869 = vadd.xlane.f32.xlu0 %v868
    %v870 = vpop.xlane.xlu0 %869
    %v871 = vadd.f32 %v732, %v733
    %872 = vadd.xlane.f32.xlu0 %v871
    %v873 = vpop.xlane.xlu0 %872
    %v874 = vadd.f32 %v734, %v735
    %875 = vadd.xlane.f32.xlu0 %v874
    %v876 = vpop.xlane.xlu0 %875
    %v877 = vadd.f32 %v736, %v737
    %878 = vadd.xlane.f32.xlu0 %v877
    %v879 = vpop.xlane.xlu0 %878
    %v880 = vadd.f32 %v738, %v739
    %881 = vadd.xlane.f32.xlu0 %v880
    %v882 = vpop.xlane.xlu0 %881
    %v883 = vadd.f32 %v740, %v741
    %884 = vadd.xlane.f32.xlu0 %v883
    %v885 = vpop.xlane.xlu0 %884
    %v886 = vmul.f32 %v744, %v501
    %v887 = vmul.f32 %v747, %v501
    %v888 = vmul.f32 %v750, %v501
    %v889 = vmul.f32 %v753, %v501
    %v890 = vmul.f32 %v756, %v501
    %v891 = vmul.f32 %v759, %v501
    %v892 = vmul.f32 %v762, %v501
    %v893 = vmul.f32 %v765, %v501
    %v894 = vmul.f32 %v768, %v501
    %v895 = vmul.f32 %v771, %v501
    %v896 = vmul.f32 %v774, %v501
    %v897 = vmul.f32 %v777, %v501
    %v898 = vmul.f32 %v780, %v501
    %v899 = vmul.f32 %v783, %v501
    %v900 = vmul.f32 %v786, %v501
    %v901 = vmul.f32 %v789, %v501
    %v902 = vmul.f32 %v792, %v501
    %v903 = vmul.f32 %v795, %v501
    %v904 = vmul.f32 %v798, %v501
    %v905 = vmul.f32 %v801, %v501
    %v906 = vmul.f32 %v804, %v501
    %v907 = vmul.f32 %v807, %v501
    %v908 = vmul.f32 %v810, %v501
    %v909 = vmul.f32 %v813, %v501
    %v910 = vmul.f32 %v816, %v501
    %v911 = vmul.f32 %v819, %v501
    %v912 = vmul.f32 %v822, %v501
    %v913 = vmul.f32 %v825, %v501
    %v914 = vmul.f32 %v828, %v501
    %v915 = vmul.f32 %v831, %v501
    %v916 = vmul.f32 %v834, %v501
    %v917 = vmul.f32 %v837, %v501
    %v918 = vmul.f32 %v840, %v501
    %v919 = vmul.f32 %v843, %v501
    %v920 = vmul.f32 %v846, %v501
    %v921 = vmul.f32 %v849, %v501
    %v922 = vmul.f32 %v852, %v501
    %v923 = vmul.f32 %v855, %v501
    %v924 = vmul.f32 %v858, %v501
    %v925 = vmul.f32 %v861, %v501
    %v926 = vmul.f32 %v864, %v501
    %v927 = vmul.f32 %v867, %v501
    %v928 = vmul.f32 %v870, %v501
    %v929 = vmul.f32 %v873, %v501
    %v930 = vmul.f32 %v876, %v501
    %v931 = vmul.f32 %v879, %v501
    %v932 = vmul.f32 %v882, %v501
    %v933 = vmul.f32 %v885, %v501
    %v934 = vadd.f32 %v886, 1e-12
    %v935 = vadd.f32 %v887, 1e-12
    %v936 = vadd.f32 %v888, 1e-12
    %v937 = vadd.f32 %v889, 1e-12
    %v938 = vadd.f32 %v890, 1e-12
    %v939 = vadd.f32 %v891, 1e-12
    %v940 = vadd.f32 %v892, 1e-12
    %v941 = vadd.f32 %v893, 1e-12
    %v942 = vadd.f32 %v894, 1e-12
    %v943 = vadd.f32 %v895, 1e-12
    %v944 = vadd.f32 %v896, 1e-12
    %v945 = vadd.f32 %v897, 1e-12
    %v946 = vadd.f32 %v898, 1e-12
    %v947 = vadd.f32 %v899, 1e-12
    %v948 = vadd.f32 %v900, 1e-12
    %v949 = vadd.f32 %v901, 1e-12
    %v950 = vadd.f32 %v902, 1e-12
    %v951 = vadd.f32 %v903, 1e-12
    %v952 = vadd.f32 %v904, 1e-12
    %v953 = vadd.f32 %v905, 1e-12
    %v954 = vadd.f32 %v906, 1e-12
    %v955 = vadd.f32 %v907, 1e-12
    %v956 = vadd.f32 %v908, 1e-12
    %v957 = vadd.f32 %v909, 1e-12
    %v958 = vadd.f32 %v910, 1e-12
    %v959 = vadd.f32 %v911, 1e-12
    %v960 = vadd.f32 %v912, 1e-12
    %v961 = vadd.f32 %v913, 1e-12
    %v962 = vadd.f32 %v914, 1e-12
    %v963 = vadd.f32 %v915, 1e-12
    %v964 = vadd.f32 %v916, 1e-12
    %v965 = vadd.f32 %v917, 1e-12
    %v966 = vadd.f32 %v918, 1e-12
    %v967 = vadd.f32 %v919, 1e-12
    %v968 = vadd.f32 %v920, 1e-12
    %v969 = vadd.f32 %v921, 1e-12
    %v970 = vadd.f32 %v922, 1e-12
    %v971 = vadd.f32 %v923, 1e-12
    %v972 = vadd.f32 %v924, 1e-12
    %v973 = vadd.f32 %v925, 1e-12
    %v974 = vadd.f32 %v926, 1e-12
    %v975 = vadd.f32 %v927, 1e-12
    %v976 = vadd.f32 %v928, 1e-12
    %v977 = vadd.f32 %v929, 1e-12
    %v978 = vadd.f32 %v930, 1e-12
    %v979 = vadd.f32 %v931, 1e-12
    %v980 = vadd.f32 %v932, 1e-12
    %v981 = vadd.f32 %v933, 1e-12
    %v982 = vrsqrt.pop %v934
    %v983 = vmul.f32 %v982, %v934
    %v984 = vmul.f32 %v983, %v982
    %v985 = vmul.f32 0.5, %v984
    %v986 = vsub.f32 1.5, %v985
    %v987 = vmul.f32 %v982, %v986
    %vm988 = vweird.f32 %v934
    %vm989 = vweird.f32 %v982
    %vm990 = vmor %vm988, %vm989
    %v991 = vsel %vm990, %v982, %v987
    %v992 = vrsqrt.pop %v935
    %v993 = vmul.f32 %v992, %v935
    %v994 = vmul.f32 %v993, %v992
    %v995 = vmul.f32 0.5, %v994
    %v996 = vsub.f32 1.5, %v995
    %v997 = vmul.f32 %v992, %v996
    %vm998 = vweird.f32 %v935
    %vm999 = vweird.f32 %v992
    %vm1000 = vmor %vm998, %vm999
    %v1001 = vsel %vm1000, %v992, %v997
    %v1002 = vrsqrt.pop %v936
    %v1003 = vmul.f32 %v1002, %v936
    %v1004 = vmul.f32 %v1003, %v1002
    %v1005 = vmul.f32 0.5, %v1004
    %v1006 = vsub.f32 1.5, %v1005
    %v1007 = vmul.f32 %v1002, %v1006
    %vm1008 = vweird.f32 %v936
    %vm1009 = vweird.f32 %v1002
    %vm1010 = vmor %vm1008, %vm1009
    %v1011 = vsel %vm1010, %v1002, %v1007
    %v1012 = vrsqrt.pop %v937
    %v1013 = vmul.f32 %v1012, %v937
    %v1014 = vmul.f32 %v1013, %v1012
    %v1015 = vmul.f32 0.5, %v1014
    %v1016 = vsub.f32 1.5, %v1015
    %v1017 = vmul.f32 %v1012, %v1016
    %vm1018 = vweird.f32 %v937
    %vm1019 = vweird.f32 %v1012
    %vm1020 = vmor %vm1018, %vm1019
    %v1021 = vsel %vm1020, %v1012, %v1017
    %v1022 = vrsqrt.pop %v938
    %v1023 = vmul.f32 %v1022, %v938
    %v1024 = vmul.f32 %v1023, %v1022
    %v1025 = vmul.f32 0.5, %v1024
    %v1026 = vsub.f32 1.5, %v1025
    %v1027 = vmul.f32 %v1022, %v1026
    %vm1028 = vweird.f32 %v938
    %vm1029 = vweird.f32 %v1022
    %vm1030 = vmor %vm1028, %vm1029
    %v1031 = vsel %vm1030, %v1022, %v1027
    %v1032 = vrsqrt.pop %v939
    %v1033 = vmul.f32 %v1032, %v939
    %v1034 = vmul.f32 %v1033, %v1032
    %v1035 = vmul.f32 0.5, %v1034
    %v1036 = vsub.f32 1.5, %v1035
    %v1037 = vmul.f32 %v1032, %v1036
    %vm1038 = vweird.f32 %v939
    %vm1039 = vweird.f32 %v1032
    %vm1040 = vmor %vm1038, %vm1039
    %v1041 = vsel %vm1040, %v1032, %v1037
    %v1042 = vrsqrt.pop %v940
    %v1043 = vmul.f32 %v1042, %v940
    %v1044 = vmul.f32 %v1043, %v1042
    %v1045 = vmul.f32 0.5, %v1044
    %v1046 = vsub.f32 1.5, %v1045
    %v1047 = vmul.f32 %v1042, %v1046
    %vm1048 = vweird.f32 %v940
    %vm1049 = vweird.f32 %v1042
    %vm1050 = vmor %vm1048, %vm1049
    %v1051 = vsel %vm1050, %v1042, %v1047
    %v1052 = vrsqrt.pop %v941
    %v1053 = vmul.f32 %v1052, %v941
    %v1054 = vmul.f32 %v1053, %v1052
    %v1055 = vmul.f32 0.5, %v1054
    %v1056 = vsub.f32 1.5, %v1055
    %v1057 = vmul.f32 %v1052, %v1056
    %vm1058 = vweird.f32 %v941
    %vm1059 = vweird.f32 %v1052
    %vm1060 = vmor %vm1058, %vm1059
    %v1061 = vsel %vm1060, %v1052, %v1057
    %v1062 = vrsqrt.pop %v942
    %v1063 = vmul.f32 %v1062, %v942
    %v1064 = vmul.f32 %v1063, %v1062
    %v1065 = vmul.f32 0.5, %v1064
    %v1066 = vsub.f32 1.5, %v1065
    %v1067 = vmul.f32 %v1062, %v1066
    %vm1068 = vweird.f32 %v942
    %vm1069 = vweird.f32 %v1062
    %vm1070 = vmor %vm1068, %vm1069
    %v1071 = vsel %vm1070, %v1062, %v1067
    %v1072 = vrsqrt.pop %v943
    %v1073 = vmul.f32 %v1072, %v943
    %v1074 = vmul.f32 %v1073, %v1072
    %v1075 = vmul.f32 0.5, %v1074
    %v1076 = vsub.f32 1.5, %v1075
    %v1077 = vmul.f32 %v1072, %v1076
    %vm1078 = vweird.f32 %v943
    %vm1079 = vweird.f32 %v1072
    %vm1080 = vmor %vm1078, %vm1079
    %v1081 = vsel %vm1080, %v1072, %v1077
    %v1082 = vrsqrt.pop %v944
    %v1083 = vmul.f32 %v1082, %v944
    %v1084 = vmul.f32 %v1083, %v1082
    %v1085 = vmul.f32 0.5, %v1084
    %v1086 = vsub.f32 1.5, %v1085
    %v1087 = vmul.f32 %v1082, %v1086
    %vm1088 = vweird.f32 %v944
    %vm1089 = vweird.f32 %v1082
    %vm1090 = vmor %vm1088, %vm1089
    %v1091 = vsel %vm1090, %v1082, %v1087
    %v1092 = vrsqrt.pop %v945
    %v1093 = vmul.f32 %v1092, %v945
    %v1094 = vmul.f32 %v1093, %v1092
    %v1095 = vmul.f32 0.5, %v1094
    %v1096 = vsub.f32 1.5, %v1095
    %v1097 = vmul.f32 %v1092, %v1096
    %vm1098 = vweird.f32 %v945
    %vm1099 = vweird.f32 %v1092
    %vm1100 = vmor %vm1098, %vm1099
    %v1101 = vsel %vm1100, %v1092, %v1097
    %v1102 = vrsqrt.pop %v946
    %v1103 = vmul.f32 %v1102, %v946
    %v1104 = vmul.f32 %v1103, %v1102
    %v1105 = vmul.f32 0.5, %v1104
    %v1106 = vsub.f32 1.5, %v1105
    %v1107 = vmul.f32 %v1102, %v1106
    %vm1108 = vweird.f32 %v946
    %vm1109 = vweird.f32 %v1102
    %vm1110 = vmor %vm1108, %vm1109
    %v1111 = vsel %vm1110, %v1102, %v1107
    %v1112 = vrsqrt.pop %v947
    %v1113 = vmul.f32 %v1112, %v947
    %v1114 = vmul.f32 %v1113, %v1112
    %v1115 = vmul.f32 0.5, %v1114
    %v1116 = vsub.f32 1.5, %v1115
    %v1117 = vmul.f32 %v1112, %v1116
    %vm1118 = vweird.f32 %v947
    %vm1119 = vweird.f32 %v1112
    %vm1120 = vmor %vm1118, %vm1119
    %v1121 = vsel %vm1120, %v1112, %v1117
    %v1122 = vrsqrt.pop %v948
    %v1123 = vmul.f32 %v1122, %v948
    %v1124 = vmul.f32 %v1123, %v1122
    %v1125 = vmul.f32 0.5, %v1124
    %v1126 = vsub.f32 1.5, %v1125
    %v1127 = vmul.f32 %v1122, %v1126
    %vm1128 = vweird.f32 %v948
    %vm1129 = vweird.f32 %v1122
    %vm1130 = vmor %vm1128, %vm1129
    %v1131 = vsel %vm1130, %v1122, %v1127
    %v1132 = vrsqrt.pop %v949
    %v1133 = vmul.f32 %v1132, %v949
    %v1134 = vmul.f32 %v1133, %v1132
    %v1135 = vmul.f32 0.5, %v1134
    %v1136 = vsub.f32 1.5, %v1135
    %v1137 = vmul.f32 %v1132, %v1136
    %vm1138 = vweird.f32 %v949
    %vm1139 = vweird.f32 %v1132
    %vm1140 = vmor %vm1138, %vm1139
    %v1141 = vsel %vm1140, %v1132, %v1137
    %v1142 = vrsqrt.pop %v950
    %v1143 = vmul.f32 %v1142, %v950
    %v1144 = vmul.f32 %v1143, %v1142
    %v1145 = vmul.f32 0.5, %v1144
    %v1146 = vsub.f32 1.5, %v1145
    %v1147 = vmul.f32 %v1142, %v1146
    %vm1148 = vweird.f32 %v950
    %vm1149 = vweird.f32 %v1142
    %vm1150 = vmor %vm1148, %vm1149
    %v1151 = vsel %vm1150, %v1142, %v1147
    %v1152 = vrsqrt.pop %v951
    %v1153 = vmul.f32 %v1152, %v951
    %v1154 = vmul.f32 %v1153, %v1152
    %v1155 = vmul.f32 0.5, %v1154
    %v1156 = vsub.f32 1.5, %v1155
    %v1157 = vmul.f32 %v1152, %v1156
    %vm1158 = vweird.f32 %v951
    %vm1159 = vweird.f32 %v1152
    %vm1160 = vmor %vm1158, %vm1159
    %v1161 = vsel %vm1160, %v1152, %v1157
    %v1162 = vrsqrt.pop %v952
    %v1163 = vmul.f32 %v1162, %v952
    %v1164 = vmul.f32 %v1163, %v1162
    %v1165 = vmul.f32 0.5, %v1164
    %v1166 = vsub.f32 1.5, %v1165
    %v1167 = vmul.f32 %v1162, %v1166
    %vm1168 = vweird.f32 %v952
    %vm1169 = vweird.f32 %v1162
    %vm1170 = vmor %vm1168, %vm1169
    %v1171 = vsel %vm1170, %v1162, %v1167
    %v1172 = vrsqrt.pop %v953
    %v1173 = vmul.f32 %v1172, %v953
    %v1174 = vmul.f32 %v1173, %v1172
    %v1175 = vmul.f32 0.5, %v1174
    %v1176 = vsub.f32 1.5, %v1175
    %v1177 = vmul.f32 %v1172, %v1176
    %vm1178 = vweird.f32 %v953
    %vm1179 = vweird.f32 %v1172
    %vm1180 = vmor %vm1178, %vm1179
    %v1181 = vsel %vm1180, %v1172, %v1177
    %v1182 = vrsqrt.pop %v954
    %v1183 = vmul.f32 %v1182, %v954
    %v1184 = vmul.f32 %v1183, %v1182
    %v1185 = vmul.f32 0.5, %v1184
    %v1186 = vsub.f32 1.5, %v1185
    %v1187 = vmul.f32 %v1182, %v1186
    %vm1188 = vweird.f32 %v954
    %vm1189 = vweird.f32 %v1182
    %vm1190 = vmor %vm1188, %vm1189
    %v1191 = vsel %vm1190, %v1182, %v1187
    %v1192 = vrsqrt.pop %v955
    %v1193 = vmul.f32 %v1192, %v955
    %v1194 = vmul.f32 %v1193, %v1192
    %v1195 = vmul.f32 0.5, %v1194
    %v1196 = vsub.f32 1.5, %v1195
    %v1197 = vmul.f32 %v1192, %v1196
    %vm1198 = vweird.f32 %v955
    %vm1199 = vweird.f32 %v1192
    %vm1200 = vmor %vm1198, %vm1199
    %v1201 = vsel %vm1200, %v1192, %v1197
    %v1202 = vrsqrt.pop %v956
    %v1203 = vmul.f32 %v1202, %v956
    %v1204 = vmul.f32 %v1203, %v1202
    %v1205 = vmul.f32 0.5, %v1204
    %v1206 = vsub.f32 1.5, %v1205
    %v1207 = vmul.f32 %v1202, %v1206
    %vm1208 = vweird.f32 %v956
    %vm1209 = vweird.f32 %v1202
    %vm1210 = vmor %vm1208, %vm1209
    %v1211 = vsel %vm1210, %v1202, %v1207
    %v1212 = vrsqrt.pop %v957
    %v1213 = vmul.f32 %v1212, %v957
    %v1214 = vmul.f32 %v1213, %v1212
    %v1215 = vmul.f32 0.5, %v1214
    %v1216 = vsub.f32 1.5, %v1215
    %v1217 = vmul.f32 %v1212, %v1216
    %vm1218 = vweird.f32 %v957
    %vm1219 = vweird.f32 %v1212
    %vm1220 = vmor %vm1218, %vm1219
    %v1221 = vsel %vm1220, %v1212, %v1217
    %v1222 = vrsqrt.pop %v958
    %v1223 = vmul.f32 %v1222, %v958
    %v1224 = vmul.f32 %v1223, %v1222
    %v1225 = vmul.f32 0.5, %v1224
    %v1226 = vsub.f32 1.5, %v1225
    %v1227 = vmul.f32 %v1222, %v1226
    %vm1228 = vweird.f32 %v958
    %vm1229 = vweird.f32 %v1222
    %vm1230 = vmor %vm1228, %vm1229
    %v1231 = vsel %vm1230, %v1222, %v1227
    %v1232 = vrsqrt.pop %v959
    %v1233 = vmul.f32 %v1232, %v959
    %v1234 = vmul.f32 %v1233, %v1232
    %v1235 = vmul.f32 0.5, %v1234
    %v1236 = vsub.f32 1.5, %v1235
    %v1237 = vmul.f32 %v1232, %v1236
    %vm1238 = vweird.f32 %v959
    %vm1239 = vweird.f32 %v1232
    %vm1240 = vmor %vm1238, %vm1239
    %v1241 = vsel %vm1240, %v1232, %v1237
    %v1242 = vrsqrt.pop %v960
    %v1243 = vmul.f32 %v1242, %v960
    %v1244 = vmul.f32 %v1243, %v1242
    %v1245 = vmul.f32 0.5, %v1244
    %v1246 = vsub.f32 1.5, %v1245
    %v1247 = vmul.f32 %v1242, %v1246
    %vm1248 = vweird.f32 %v960
    %vm1249 = vweird.f32 %v1242
    %vm1250 = vmor %vm1248, %vm1249
    %v1251 = vsel %vm1250, %v1242, %v1247
    %v1252 = vrsqrt.pop %v961
    %v1253 = vmul.f32 %v1252, %v961
    %v1254 = vmul.f32 %v1253, %v1252
    %v1255 = vmul.f32 0.5, %v1254
    %v1256 = vsub.f32 1.5, %v1255
    %v1257 = vmul.f32 %v1252, %v1256
    %vm1258 = vweird.f32 %v961
    %vm1259 = vweird.f32 %v1252
    %vm1260 = vmor %vm1258, %vm1259
    %v1261 = vsel %vm1260, %v1252, %v1257
    %v1262 = vrsqrt.pop %v962
    %v1263 = vmul.f32 %v1262, %v962
    %v1264 = vmul.f32 %v1263, %v1262
    %v1265 = vmul.f32 0.5, %v1264
    %v1266 = vsub.f32 1.5, %v1265
    %v1267 = vmul.f32 %v1262, %v1266
    %vm1268 = vweird.f32 %v962
    %vm1269 = vweird.f32 %v1262
    %vm1270 = vmor %vm1268, %vm1269
    %v1271 = vsel %vm1270, %v1262, %v1267
    %v1272 = vrsqrt.pop %v963
    %v1273 = vmul.f32 %v1272, %v963
    %v1274 = vmul.f32 %v1273, %v1272
    %v1275 = vmul.f32 0.5, %v1274
    %v1276 = vsub.f32 1.5, %v1275
    %v1277 = vmul.f32 %v1272, %v1276
    %vm1278 = vweird.f32 %v963
    %vm1279 = vweird.f32 %v1272
    %vm1280 = vmor %vm1278, %vm1279
    %v1281 = vsel %vm1280, %v1272, %v1277
    %v1282 = vrsqrt.pop %v964
    %v1283 = vmul.f32 %v1282, %v964
    %v1284 = vmul.f32 %v1283, %v1282
    %v1285 = vmul.f32 0.5, %v1284
    %v1286 = vsub.f32 1.5, %v1285
    %v1287 = vmul.f32 %v1282, %v1286
    %vm1288 = vweird.f32 %v964
    %vm1289 = vweird.f32 %v1282
    %vm1290 = vmor %vm1288, %vm1289
    %v1291 = vsel %vm1290, %v1282, %v1287
    %v1292 = vrsqrt.pop %v965
    %v1293 = vmul.f32 %v1292, %v965
    %v1294 = vmul.f32 %v1293, %v1292
    %v1295 = vmul.f32 0.5, %v1294
    %v1296 = vsub.f32 1.5, %v1295
    %v1297 = vmul.f32 %v1292, %v1296
    %vm1298 = vweird.f32 %v965
    %vm1299 = vweird.f32 %v1292
    %vm1300 = vmor %vm1298, %vm1299
    %v1301 = vsel %vm1300, %v1292, %v1297
    %v1302 = vrsqrt.pop %v966
    %v1303 = vmul.f32 %v1302, %v966
    %v1304 = vmul.f32 %v1303, %v1302
    %v1305 = vmul.f32 0.5, %v1304
    %v1306 = vsub.f32 1.5, %v1305
    %v1307 = vmul.f32 %v1302, %v1306
    %vm1308 = vweird.f32 %v966
    %vm1309 = vweird.f32 %v1302
    %vm1310 = vmor %vm1308, %vm1309
    %v1311 = vsel %vm1310, %v1302, %v1307
    %v1312 = vrsqrt.pop %v967
    %v1313 = vmul.f32 %v1312, %v967
    %v1314 = vmul.f32 %v1313, %v1312
    %v1315 = vmul.f32 0.5, %v1314
    %v1316 = vsub.f32 1.5, %v1315
    %v1317 = vmul.f32 %v1312, %v1316
    %vm1318 = vweird.f32 %v967
    %vm1319 = vweird.f32 %v1312
    %vm1320 = vmor %vm1318, %vm1319
    %v1321 = vsel %vm1320, %v1312, %v1317
    %v1322 = vrsqrt.pop %v968
    %v1323 = vmul.f32 %v1322, %v968
    %v1324 = vmul.f32 %v1323, %v1322
    %v1325 = vmul.f32 0.5, %v1324
    %v1326 = vsub.f32 1.5, %v1325
    %v1327 = vmul.f32 %v1322, %v1326
    %vm1328 = vweird.f32 %v968
    %vm1329 = vweird.f32 %v1322
    %vm1330 = vmor %vm1328, %vm1329
    %v1331 = vsel %vm1330, %v1322, %v1327
    %v1332 = vrsqrt.pop %v969
    %v1333 = vmul.f32 %v1332, %v969
    %v1334 = vmul.f32 %v1333, %v1332
    %v1335 = vmul.f32 0.5, %v1334
    %v1336 = vsub.f32 1.5, %v1335
    %v1337 = vmul.f32 %v1332, %v1336
    %vm1338 = vweird.f32 %v969
    %vm1339 = vweird.f32 %v1332
    %vm1340 = vmor %vm1338, %vm1339
    %v1341 = vsel %vm1340, %v1332, %v1337
    %v1342 = vrsqrt.pop %v970
    %v1343 = vmul.f32 %v1342, %v970
    %v1344 = vmul.f32 %v1343, %v1342
    %v1345 = vmul.f32 0.5, %v1344
    %v1346 = vsub.f32 1.5, %v1345
    %v1347 = vmul.f32 %v1342, %v1346
    %vm1348 = vweird.f32 %v970
    %vm1349 = vweird.f32 %v1342
    %vm1350 = vmor %vm1348, %vm1349
    %v1351 = vsel %vm1350, %v1342, %v1347
    %v1352 = vrsqrt.pop %v971
    %v1353 = vmul.f32 %v1352, %v971
    %v1354 = vmul.f32 %v1353, %v1352
    %v1355 = vmul.f32 0.5, %v1354
    %v1356 = vsub.f32 1.5, %v1355
    %v1357 = vmul.f32 %v1352, %v1356
    %vm1358 = vweird.f32 %v971
    %vm1359 = vweird.f32 %v1352
    %vm1360 = vmor %vm1358, %vm1359
    %v1361 = vsel %vm1360, %v1352, %v1357
    %v1362 = vrsqrt.pop %v972
    %v1363 = vmul.f32 %v1362, %v972
    %v1364 = vmul.f32 %v1363, %v1362
    %v1365 = vmul.f32 0.5, %v1364
    %v1366 = vsub.f32 1.5, %v1365
    %v1367 = vmul.f32 %v1362, %v1366
    %vm1368 = vweird.f32 %v972
    %vm1369 = vweird.f32 %v1362
    %vm1370 = vmor %vm1368, %vm1369
    %v1371 = vsel %vm1370, %v1362, %v1367
    %v1372 = vrsqrt.pop %v973
    %v1373 = vmul.f32 %v1372, %v973
    %v1374 = vmul.f32 %v1373, %v1372
    %v1375 = vmul.f32 0.5, %v1374
    %v1376 = vsub.f32 1.5, %v1375
    %v1377 = vmul.f32 %v1372, %v1376
    %vm1378 = vweird.f32 %v973
    %vm1379 = vweird.f32 %v1372
    %vm1380 = vmor %vm1378, %vm1379
    %v1381 = vsel %vm1380, %v1372, %v1377
    %v1382 = vrsqrt.pop %v974
    %v1383 = vmul.f32 %v1382, %v974
    %v1384 = vmul.f32 %v1383, %v1382
    %v1385 = vmul.f32 0.5, %v1384
    %v1386 = vsub.f32 1.5, %v1385
    %v1387 = vmul.f32 %v1382, %v1386
    %vm1388 = vweird.f32 %v974
    %vm1389 = vweird.f32 %v1382
    %vm1390 = vmor %vm1388, %vm1389
    %v1391 = vsel %vm1390, %v1382, %v1387
    %v1392 = vrsqrt.pop %v975
    %v1393 = vmul.f32 %v1392, %v975
    %v1394 = vmul.f32 %v1393, %v1392
    %v1395 = vmul.f32 0.5, %v1394
    %v1396 = vsub.f32 1.5, %v1395
    %v1397 = vmul.f32 %v1392, %v1396
    %vm1398 = vweird.f32 %v975
    %vm1399 = vweird.f32 %v1392
    %vm1400 = vmor %vm1398, %vm1399
    %v1401 = vsel %vm1400, %v1392, %v1397
    %v1402 = vrsqrt.pop %v976
    %v1403 = vmul.f32 %v1402, %v976
    %v1404 = vmul.f32 %v1403, %v1402
    %v1405 = vmul.f32 0.5, %v1404
    %v1406 = vsub.f32 1.5, %v1405
    %v1407 = vmul.f32 %v1402, %v1406
    %vm1408 = vweird.f32 %v976
    %vm1409 = vweird.f32 %v1402
    %vm1410 = vmor %vm1408, %vm1409
    %v1411 = vsel %vm1410, %v1402, %v1407
    %v1412 = vrsqrt.pop %v977
    %v1413 = vmul.f32 %v1412, %v977
    %v1414 = vmul.f32 %v1413, %v1412
    %v1415 = vmul.f32 0.5, %v1414
    %v1416 = vsub.f32 1.5, %v1415
    %v1417 = vmul.f32 %v1412, %v1416
    %vm1418 = vweird.f32 %v977
    %vm1419 = vweird.f32 %v1412
    %vm1420 = vmor %vm1418, %vm1419
    %v1421 = vsel %vm1420, %v1412, %v1417
    %v1422 = vrsqrt.pop %v978
    %v1423 = vmul.f32 %v1422, %v978
    %v1424 = vmul.f32 %v1423, %v1422
    %v1425 = vmul.f32 0.5, %v1424
    %v1426 = vsub.f32 1.5, %v1425
    %v1427 = vmul.f32 %v1422, %v1426
    %vm1428 = vweird.f32 %v978
    %vm1429 = vweird.f32 %v1422
    %vm1430 = vmor %vm1428, %vm1429
    %v1431 = vsel %vm1430, %v1422, %v1427
    %v1432 = vrsqrt.pop %v979
    %v1433 = vmul.f32 %v1432, %v979
    %v1434 = vmul.f32 %v1433, %v1432
    %v1435 = vmul.f32 0.5, %v1434
    %v1436 = vsub.f32 1.5, %v1435
    %v1437 = vmul.f32 %v1432, %v1436
    %vm1438 = vweird.f32 %v979
    %vm1439 = vweird.f32 %v1432
    %vm1440 = vmor %vm1438, %vm1439
    %v1441 = vsel %vm1440, %v1432, %v1437
    %v1442 = vrsqrt.pop %v980
    %v1443 = vmul.f32 %v1442, %v980
    %v1444 = vmul.f32 %v1443, %v1442
    %v1445 = vmul.f32 0.5, %v1444
    %v1446 = vsub.f32 1.5, %v1445
    %v1447 = vmul.f32 %v1442, %v1446
    %vm1448 = vweird.f32 %v980
    %vm1449 = vweird.f32 %v1442
    %vm1450 = vmor %vm1448, %vm1449
    %v1451 = vsel %vm1450, %v1442, %v1447
    %v1452 = vrsqrt.pop %v981
    %v1453 = vmul.f32 %v1452, %v981
    %v1454 = vmul.f32 %v1453, %v1452
    %v1455 = vmul.f32 0.5, %v1454
    %v1456 = vsub.f32 1.5, %v1455
    %v1457 = vmul.f32 %v1452, %v1456
    %vm1458 = vweird.f32 %v981
    %vm1459 = vweird.f32 %v1452
    %vm1460 = vmor %vm1458, %vm1459
    %v1461 = vsel %vm1460, %v1452, %v1457
    %v1462 = vmul.f32 %v550, %v991
    %v1463 = vmul.f32 %v551, %v991
    %v1464 = vmul.f32 %v552, %v1001
    %v1465 = vmul.f32 %v553, %v1001
    %v1466 = vmul.f32 %v554, %v1011
    %v1467 = vmul.f32 %v555, %v1011
    %v1468 = vmul.f32 %v556, %v1021
    %v1469 = vmul.f32 %v557, %v1021
    %v1470 = vmul.f32 %v558, %v1031
    %v1471 = vmul.f32 %v559, %v1031
    %v1472 = vmul.f32 %v560, %v1041
    %v1473 = vmul.f32 %v561, %v1041
    %v1474 = vmul.f32 %v562, %v1051
    %v1475 = vmul.f32 %v563, %v1051
    %v1476 = vmul.f32 %v564, %v1061
    %v1477 = vmul.f32 %v565, %v1061
    %v1478 = vmul.f32 %v566, %v1071
    %v1479 = vmul.f32 %v567, %v1071
    %v1480 = vmul.f32 %v568, %v1081
    %v1481 = vmul.f32 %v569, %v1081
    %v1482 = vmul.f32 %v570, %v1091
    %v1483 = vmul.f32 %v571, %v1091
    %v1484 = vmul.f32 %v572, %v1101
    %v1485 = vmul.f32 %v573, %v1101
    %v1486 = vmul.f32 %v574, %v1111
    %v1487 = vmul.f32 %v575, %v1111
    %v1488 = vmul.f32 %v576, %v1121
    %v1489 = vmul.f32 %v577, %v1121
    %v1490 = vmul.f32 %v578, %v1131
    %v1491 = vmul.f32 %v579, %v1131
    %v1492 = vmul.f32 %v580, %v1141
    %v1493 = vmul.f32 %v581, %v1141
    %v1494 = vmul.f32 %v582, %v1151
    %v1495 = vmul.f32 %v583, %v1151
    %v1496 = vmul.f32 %v584, %v1161
    %v1497 = vmul.f32 %v585, %v1161
    %v1498 = vmul.f32 %v586, %v1171
    %v1499 = vmul.f32 %v587, %v1171
    %v1500 = vmul.f32 %v588, %v1181
    %v1501 = vmul.f32 %v589, %v1181
    %v1502 = vmul.f32 %v590, %v1191
    %v1503 = vmul.f32 %v591, %v1191
    %v1504 = vmul.f32 %v592, %v1201
    %v1505 = vmul.f32 %v593, %v1201
    %v1506 = vmul.f32 %v594, %v1211
    %v1507 = vmul.f32 %v595, %v1211
    %v1508 = vmul.f32 %v596, %v1221
    %v1509 = vmul.f32 %v597, %v1221
    %v1510 = vmul.f32 %v598, %v1231
    %v1511 = vmul.f32 %v599, %v1231
    %v1512 = vmul.f32 %v600, %v1241
    %v1513 = vmul.f32 %v601, %v1241
    %v1514 = vmul.f32 %v602, %v1251
    %v1515 = vmul.f32 %v603, %v1251
    %v1516 = vmul.f32 %v604, %v1261
    %v1517 = vmul.f32 %v605, %v1261
    %v1518 = vmul.f32 %v606, %v1271
    %v1519 = vmul.f32 %v607, %v1271
    %v1520 = vmul.f32 %v608, %v1281
    %v1521 = vmul.f32 %v609, %v1281
    %v1522 = vmul.f32 %v610, %v1291
    %v1523 = vmul.f32 %v611, %v1291
    %v1524 = vmul.f32 %v612, %v1301
    %v1525 = vmul.f32 %v613, %v1301
    %v1526 = vmul.f32 %v614, %v1311
    %v1527 = vmul.f32 %v615, %v1311
    %v1528 = vmul.f32 %v616, %v1321
    %v1529 = vmul.f32 %v617, %v1321
    %v1530 = vmul.f32 %v618, %v1331
    %v1531 = vmul.f32 %v619, %v1331
    %v1532 = vmul.f32 %v620, %v1341
    %v1533 = vmul.f32 %v621, %v1341
    %v1534 = vmul.f32 %v622, %v1351
    %v1535 = vmul.f32 %v623, %v1351
    %v1536 = vmul.f32 %v624, %v1361
    %v1537 = vmul.f32 %v625, %v1361
    %v1538 = vmul.f32 %v626, %v1371
    %v1539 = vmul.f32 %v627, %v1371
    %v1540 = vmul.f32 %v628, %v1381
    %v1541 = vmul.f32 %v629, %v1381
    %v1542 = vmul.f32 %v630, %v1391
    %v1543 = vmul.f32 %v631, %v1391
    %v1544 = vmul.f32 %v632, %v1401
    %v1545 = vmul.f32 %v633, %v1401
    %v1546 = vmul.f32 %v634, %v1411
    %v1547 = vmul.f32 %v635, %v1411
    %v1548 = vmul.f32 %v636, %v1421
    %v1549 = vmul.f32 %v637, %v1421
    %v1550 = vmul.f32 %v638, %v1431
    %v1551 = vmul.f32 %v639, %v1431
    %v1552 = vmul.f32 %v640, %v1441
    %v1553 = vmul.f32 %v641, %v1441
    %v1554 = vmul.f32 %v642, %v1451
    %v1555 = vmul.f32 %v643, %v1451
    %v1556 = vmul.f32 %v644, %v1461
    %v1557 = vmul.f32 %v645, %v1461
    %v1558 = vld [vmem:[#allocation7] sm:$0x3]
    %v1560 = vperm.slane %v1558, 0
    %v1561 = vperm.slane %v1558, 1
    %v1564 = vmul.f32 %v1462, %v1560
    %v1565 = vmul.f32 %v1463, %v1561
    %v1566 = vmul.f32 %v1464, %v1560
    %v1567 = vmul.f32 %v1465, %v1561
    %v1568 = vmul.f32 %v1466, %v1560
    %v1569 = vmul.f32 %v1467, %v1561
    %v1570 = vmul.f32 %v1468, %v1560
    %v1571 = vmul.f32 %v1469, %v1561
    %v1572 = vmul.f32 %v1470, %v1560
    %v1573 = vmul.f32 %v1471, %v1561
    %v1574 = vmul.f32 %v1472, %v1560
    %v1575 = vmul.f32 %v1473, %v1561
    %v1576 = vmul.f32 %v1474, %v1560
    %v1577 = vmul.f32 %v1475, %v1561
    %v1578 = vmul.f32 %v1476, %v1560
    %v1579 = vmul.f32 %v1477, %v1561
    %v1580 = vmul.f32 %v1478, %v1560
    %v1581 = vmul.f32 %v1479, %v1561
    %v1582 = vmul.f32 %v1480, %v1560
    %v1583 = vmul.f32 %v1481, %v1561
    %v1584 = vmul.f32 %v1482, %v1560
    %v1585 = vmul.f32 %v1483, %v1561
    %v1586 = vmul.f32 %v1484, %v1560
    %v1587 = vmul.f32 %v1485, %v1561
    %v1588 = vmul.f32 %v1486, %v1560
    %v1589 = vmul.f32 %v1487, %v1561
    %v1590 = vmul.f32 %v1488, %v1560
    %v1591 = vmul.f32 %v1489, %v1561
    %v1592 = vmul.f32 %v1490, %v1560
    %v1593 = vmul.f32 %v1491, %v1561
    %v1594 = vmul.f32 %v1492, %v1560
    %v1595 = vmul.f32 %v1493, %v1561
    %v1596 = vmul.f32 %v1494, %v1560
    %v1597 = vmul.f32 %v1495, %v1561
    %v1598 = vmul.f32 %v1496, %v1560
    %v1599 = vmul.f32 %v1497, %v1561
    %v1600 = vmul.f32 %v1498, %v1560
    %v1601 = vmul.f32 %v1499, %v1561
    %v1602 = vmul.f32 %v1500, %v1560
    %v1603 = vmul.f32 %v1501, %v1561
    %v1604 = vmul.f32 %v1502, %v1560
    %v1605 = vmul.f32 %v1503, %v1561
    %v1606 = vmul.f32 %v1504, %v1560
    %v1607 = vmul.f32 %v1505, %v1561
    %v1608 = vmul.f32 %v1506, %v1560
    %v1609 = vmul.f32 %v1507, %v1561
    %v1610 = vmul.f32 %v1508, %v1560
    %v1611 = vmul.f32 %v1509, %v1561
    %v1612 = vmul.f32 %v1510, %v1560
    %v1613 = vmul.f32 %v1511, %v1561
    %v1614 = vmul.f32 %v1512, %v1560
    %v1615 = vmul.f32 %v1513, %v1561
    %v1616 = vmul.f32 %v1514, %v1560
    %v1617 = vmul.f32 %v1515, %v1561
    %v1618 = vmul.f32 %v1516, %v1560
    %v1619 = vmul.f32 %v1517, %v1561
    %v1620 = vmul.f32 %v1518, %v1560
    %v1621 = vmul.f32 %v1519, %v1561
    %v1622 = vmul.f32 %v1520, %v1560
    %v1623 = vmul.f32 %v1521, %v1561
    %v1624 = vmul.f32 %v1522, %v1560
    %v1625 = vmul.f32 %v1523, %v1561
    %v1626 = vmul.f32 %v1524, %v1560
    %v1627 = vmul.f32 %v1525, %v1561
    %v1628 = vmul.f32 %v1526, %v1560
    %v1629 = vmul.f32 %v1527, %v1561
    %v1630 = vmul.f32 %v1528, %v1560
    %v1631 = vmul.f32 %v1529, %v1561
    %v1632 = vmul.f32 %v1530, %v1560
    %v1633 = vmul.f32 %v1531, %v1561
    %v1634 = vmul.f32 %v1532, %v1560
    %v1635 = vmul.f32 %v1533, %v1561
    %v1636 = vmul.f32 %v1534, %v1560
    %v1637 = vmul.f32 %v1535, %v1561
    %v1638 = vmul.f32 %v1536, %v1560
    %v1639 = vmul.f32 %v1537, %v1561
    %v1640 = vmul.f32 %v1538, %v1560
    %v1641 = vmul.f32 %v1539, %v1561
    %v1642 = vmul.f32 %v1540, %v1560
    %v1643 = vmul.f32 %v1541, %v1561
    %v1644 = vmul.f32 %v1542, %v1560
    %v1645 = vmul.f32 %v1543, %v1561
    %v1646 = vmul.f32 %v1544, %v1560
    %v1647 = vmul.f32 %v1545, %v1561
    %v1648 = vmul.f32 %v1546, %v1560
    %v1649 = vmul.f32 %v1547, %v1561
    %v1650 = vmul.f32 %v1548, %v1560
    %v1651 = vmul.f32 %v1549, %v1561
    %v1652 = vmul.f32 %v1550, %v1560
    %v1653 = vmul.f32 %v1551, %v1561
    %v1654 = vmul.f32 %v1552, %v1560
    %v1655 = vmul.f32 %v1553, %v1561
    %v1656 = vmul.f32 %v1554, %v1560
    %v1657 = vmul.f32 %v1555, %v1561
    %v1658 = vmul.f32 %v1556, %v1560
    %v1659 = vmul.f32 %v1557, %v1561
    %v1660 = vld [vmem:[%s3] sm:$0x3]
    %v1662 = vperm.slane %v1660, 0
    %v1663 = vperm.slane %v1660, 1
    %v1666 = vadd.f32 %v1564, %v1662
    %v1667 = vadd.f32 %v1565, %v1663
    %v1668 = vadd.f32 %v1566, %v1662
    %v1669 = vadd.f32 %v1567, %v1663
    %v1670 = vadd.f32 %v1568, %v1662
    %v1671 = vadd.f32 %v1569, %v1663
    %v1672 = vadd.f32 %v1570, %v1662
    %v1673 = vadd.f32 %v1571, %v1663
    %v1674 = vadd.f32 %v1572, %v1662
    %v1675 = vadd.f32 %v1573, %v1663
    %v1676 = vadd.f32 %v1574, %v1662
    %v1677 = vadd.f32 %v1575, %v1663
    %v1678 = vadd.f32 %v1576, %v1662
    %v1679 = vadd.f32 %v1577, %v1663
    %v1680 = vadd.f32 %v1578, %v1662
    %v1681 = vadd.f32 %v1579, %v1663
    %v1682 = vadd.f32 %v1580, %v1662
    %v1683 = vadd.f32 %v1581, %v1663
    %v1684 = vadd.f32 %v1582, %v1662
    %v1685 = vadd.f32 %v1583, %v1663
    %v1686 = vadd.f32 %v1584, %v1662
    %v1687 = vadd.f32 %v1585, %v1663
    %v1688 = vadd.f32 %v1586, %v1662
    %v1689 = vadd.f32 %v1587, %v1663
    %v1690 = vadd.f32 %v1588, %v1662
    %v1691 = vadd.f32 %v1589, %v1663
    %v1692 = vadd.f32 %v1590, %v1662
    %v1693 = vadd.f32 %v1591, %v1663
    %v1694 = vadd.f32 %v1592, %v1662
    %v1695 = vadd.f32 %v1593, %v1663
    %v1696 = vadd.f32 %v1594, %v1662
    %v1697 = vadd.f32 %v1595, %v1663
    %v1698 = vadd.f32 %v1596, %v1662
    %v1699 = vadd.f32 %v1597, %v1663
    %v1700 = vadd.f32 %v1598, %v1662
    %v1701 = vadd.f32 %v1599, %v1663
    %v1702 = vadd.f32 %v1600, %v1662
    %v1703 = vadd.f32 %v1601, %v1663
    %v1704 = vadd.f32 %v1602, %v1662
    %v1705 = vadd.f32 %v1603, %v1663
    %v1706 = vadd.f32 %v1604, %v1662
    %v1707 = vadd.f32 %v1605, %v1663
    %v1708 = vadd.f32 %v1606, %v1662
    %v1709 = vadd.f32 %v1607, %v1663
    %v1710 = vadd.f32 %v1608, %v1662
    %v1711 = vadd.f32 %v1609, %v1663
    %v1712 = vadd.f32 %v1610, %v1662
    %v1713 = vadd.f32 %v1611, %v1663
    %v1714 = vadd.f32 %v1612, %v1662
    %v1715 = vadd.f32 %v1613, %v1663
    %v1716 = vadd.f32 %v1614, %v1662
    %v1717 = vadd.f32 %v1615, %v1663
    %v1718 = vadd.f32 %v1616, %v1662
    %v1719 = vadd.f32 %v1617, %v1663
    %v1720 = vadd.f32 %v1618, %v1662
    %v1721 = vadd.f32 %v1619, %v1663
    %v1722 = vadd.f32 %v1620, %v1662
    %v1723 = vadd.f32 %v1621, %v1663
    %v1724 = vadd.f32 %v1622, %v1662
    %v1725 = vadd.f32 %v1623, %v1663
    %v1726 = vadd.f32 %v1624, %v1662
    %v1727 = vadd.f32 %v1625, %v1663
    %v1728 = vadd.f32 %v1626, %v1662
    %v1729 = vadd.f32 %v1627, %v1663
    %v1730 = vadd.f32 %v1628, %v1662
    %v1731 = vadd.f32 %v1629, %v1663
    %v1732 = vadd.f32 %v1630, %v1662
    %v1733 = vadd.f32 %v1631, %v1663
    %v1734 = vadd.f32 %v1632, %v1662
    %v1735 = vadd.f32 %v1633, %v1663
    %v1736 = vadd.f32 %v1634, %v1662
    %v1737 = vadd.f32 %v1635, %v1663
    %v1738 = vadd.f32 %v1636, %v1662
    %v1739 = vadd.f32 %v1637, %v1663
    %v1740 = vadd.f32 %v1638, %v1662
    %v1741 = vadd.f32 %v1639, %v1663
    %v1742 = vadd.f32 %v1640, %v1662
    %v1743 = vadd.f32 %v1641, %v1663
    %v1744 = vadd.f32 %v1642, %v1662
    %v1745 = vadd.f32 %v1643, %v1663
    %v1746 = vadd.f32 %v1644, %v1662
    %v1747 = vadd.f32 %v1645, %v1663
    %v1748 = vadd.f32 %v1646, %v1662
    %v1749 = vadd.f32 %v1647, %v1663
    %v1750 = vadd.f32 %v1648, %v1662
    %v1751 = vadd.f32 %v1649, %v1663
    %v1752 = vadd.f32 %v1650, %v1662
    %v1753 = vadd.f32 %v1651, %v1663
    %v1754 = vadd.f32 %v1652, %v1662
    %v1755 = vadd.f32 %v1653, %v1663
    %v1756 = vadd.f32 %v1654, %v1662
    %v1757 = vadd.f32 %v1655, %v1663
    %v1758 = vadd.f32 %v1656, %v1662
    %v1759 = vadd.f32 %v1657, %v1663
    %v1760 = vadd.f32 %v1658, %v1662
    %v1761 = vadd.f32 %v1659, %v1663
    %1762 = vst [vmem:[#allocation8] sm:$0xff] %v1666
    %1763 = vst [vmem:[#allocation8 + $0x8] sm:$0xff] %v1667
    %1764 = vst [vmem:[#allocation8 + $0x10] sm:$0xff] %v1668
    %1765 = vst [vmem:[#allocation8 + $0x18] sm:$0xff] %v1669
    %1766 = vst [vmem:[#allocation8 + $0x20] sm:$0xff] %v1670
    %1767 = vst [vmem:[#allocation8 + $0x28] sm:$0xff] %v1671
    %1768 = vst [vmem:[#allocation8 + $0x30] sm:$0xff] %v1672
    %1769 = vst [vmem:[#allocation8 + $0x38] sm:$0xff] %v1673
    %1770 = vst [vmem:[#allocation8 + $0x40] sm:$0xff] %v1674
    %1771 = vst [vmem:[#allocation8 + $0x48] sm:$0xff] %v1675
    %1772 = vst [vmem:[#allocation8 + $0x50] sm:$0xff] %v1676
    %1773 = vst [vmem:[#allocation8 + $0x58] sm:$0xff] %v1677
    %1774 = vst [vmem:[#allocation8 + $0x60] sm:$0xff] %v1678
    %1775 = vst [vmem:[#allocation8 + $0x68] sm:$0xff] %v1679
    %1776 = vst [vmem:[#allocation8 + $0x70] sm:$0xff] %v1680
    %1777 = vst [vmem:[#allocation8 + $0x78] sm:$0xff] %v1681
    %1778 = vst [vmem:[#allocation8 + $0x80] sm:$0xff] %v1682
    %1779 = vst [vmem:[#allocation8 + $0x88] sm:$0xff] %v1683
    %1780 = vst [vmem:[#allocation8 + $0x90] sm:$0xff] %v1684
    %1781 = vst [vmem:[#allocation8 + $0x98] sm:$0xff] %v1685
    %1782 = vst [vmem:[#allocation8 + $0xa0] sm:$0xff] %v1686
    %1783 = vst [vmem:[#allocation8 + $0xa8] sm:$0xff] %v1687
    %1784 = vst [vmem:[#allocation8 + $0xb0] sm:$0xff] %v1688
    %1785 = vst [vmem:[#allocation8 + $0xb8] sm:$0xff] %v1689
    %1786 = vst [vmem:[#allocation8 + $0xc0] sm:$0xff] %v1690
    %1787 = vst [vmem:[#allocation8 + $0xc8] sm:$0xff] %v1691
    %1788 = vst [vmem:[#allocation8 + $0xd0] sm:$0xff] %v1692
    %1789 = vst [vmem:[#allocation8 + $0xd8] sm:$0xff] %v1693
    %1790 = vst [vmem:[#allocation8 + $0xe0] sm:$0xff] %v1694
    %1791 = vst [vmem:[#allocation8 + $0xe8] sm:$0xff] %v1695
    %1792 = vst [vmem:[#allocation8 + $0xf0] sm:$0xff] %v1696
    %1793 = vst [vmem:[#allocation8 + $0xf8] sm:$0xff] %v1697
    %1794 = vst [vmem:[#allocation8 + $0x100] sm:$0xff] %v1698
    %1795 = vst [vmem:[#allocation8 + $0x108] sm:$0xff] %v1699
    %1796 = vst [vmem:[#allocation8 + $0x110] sm:$0xff] %v1700
    %1797 = vst [vmem:[#allocation8 + $0x118] sm:$0xff] %v1701
    %1798 = vst [vmem:[#allocation8 + $0x120] sm:$0xff] %v1702
    %1799 = vst [vmem:[#allocation8 + $0x128] sm:$0xff] %v1703
    %1800 = vst [vmem:[#allocation8 + $0x130] sm:$0xff] %v1704
    %1801 = vst [vmem:[#allocation8 + $0x138] sm:$0xff] %v1705
    %1802 = vst [vmem:[#allocation8 + $0x140] sm:$0xff] %v1706
    %1803 = vst [vmem:[#allocation8 + $0x148] sm:$0xff] %v1707
    %1804 = vst [vmem:[#allocation8 + $0x150] sm:$0xff] %v1708
    %1805 = vst [vmem:[#allocation8 + $0x158] sm:$0xff] %v1709
    %1806 = vst [vmem:[#allocation8 + $0x160] sm:$0xff] %v1710
    %1807 = vst [vmem:[#allocation8 + $0x168] sm:$0xff] %v1711
    %1808 = vst [vmem:[#allocation8 + $0x170] sm:$0xff] %v1712
    %1809 = vst [vmem:[#allocation8 + $0x178] sm:$0xff] %v1713
    %1810 = vst [vmem:[#allocation8 + $0x180] sm:$0xff] %v1714
    %1811 = vst [vmem:[#allocation8 + $0x188] sm:$0xff] %v1715
    %1812 = vst [vmem:[#allocation8 + $0x190] sm:$0xff] %v1716
    %1813 = vst [vmem:[#allocation8 + $0x198] sm:$0xff] %v1717
    %1814 = vst [vmem:[#allocation8 + $0x1a0] sm:$0xff] %v1718
    %1815 = vst [vmem:[#allocation8 + $0x1a8] sm:$0xff] %v1719
    %1816 = vst [vmem:[#allocation8 + $0x1b0] sm:$0xff] %v1720
    %1817 = vst [vmem:[#allocation8 + $0x1b8] sm:$0xff] %v1721
    %1818 = vst [vmem:[#allocation8 + $0x1c0] sm:$0xff] %v1722
    %1819 = vst [vmem:[#allocation8 + $0x1c8] sm:$0xff] %v1723
    %1820 = vst [vmem:[#allocation8 + $0x1d0] sm:$0xff] %v1724
    %1821 = vst [vmem:[#allocation8 + $0x1d8] sm:$0xff] %v1725
    %1822 = vst [vmem:[#allocation8 + $0x1e0] sm:$0xff] %v1726
    %1823 = vst [vmem:[#allocation8 + $0x1e8] sm:$0xff] %v1727
    %1824 = vst [vmem:[#allocation8 + $0x1f0] sm:$0xff] %v1728
    %1825 = vst [vmem:[#allocation8 + $0x1f8] sm:$0xff] %v1729
    %1826 = vst [vmem:[#allocation8 + $0x200] sm:$0xff] %v1730
    %1827 = vst [vmem:[#allocation8 + $0x208] sm:$0xff] %v1731
    %1828 = vst [vmem:[#allocation8 + $0x210] sm:$0xff] %v1732
    %1829 = vst [vmem:[#allocation8 + $0x218] sm:$0xff] %v1733
    %1830 = vst [vmem:[#allocation8 + $0x220] sm:$0xff] %v1734
    %1831 = vst [vmem:[#allocation8 + $0x228] sm:$0xff] %v1735
    %1832 = vst [vmem:[#allocation8 + $0x230] sm:$0xff] %v1736
    %1833 = vst [vmem:[#allocation8 + $0x238] sm:$0xff] %v1737
    %1834 = vst [vmem:[#allocation8 + $0x240] sm:$0xff] %v1738
    %1835 = vst [vmem:[#allocation8 + $0x248] sm:$0xff] %v1739
    %1836 = vst [vmem:[#allocation8 + $0x250] sm:$0xff] %v1740
    %1837 = vst [vmem:[#allocation8 + $0x258] sm:$0xff] %v1741
    %1838 = vst [vmem:[#allocation8 + $0x260] sm:$0xff] %v1742
    %1839 = vst [vmem:[#allocation8 + $0x268] sm:$0xff] %v1743
    %1840 = vst [vmem:[#allocation8 + $0x270] sm:$0xff] %v1744
    %1841 = vst [vmem:[#allocation8 + $0x278] sm:$0xff] %v1745
    %1842 = vst [vmem:[#allocation8 + $0x280] sm:$0xff] %v1746
    %1843 = vst [vmem:[#allocation8 + $0x288] sm:$0xff] %v1747
    %1844 = vst [vmem:[#allocation8 + $0x290] sm:$0xff] %v1748
    %1845 = vst [vmem:[#allocation8 + $0x298] sm:$0xff] %v1749
    %1846 = vst [vmem:[#allocation8 + $0x2a0] sm:$0xff] %v1750
    %1847 = vst [vmem:[#allocation8 + $0x2a8] sm:$0xff] %v1751
    %1848 = vst [vmem:[#allocation8 + $0x2b0] sm:$0xff] %v1752
    %1849 = vst [vmem:[#allocation8 + $0x2b8] sm:$0xff] %v1753
    %1850 = vst [vmem:[#allocation8 + $0x2c0] sm:$0xff] %v1754
    %1851 = vst [vmem:[#allocation8 + $0x2c8] sm:$0xff] %v1755
    %1852 = vst [vmem:[#allocation8 + $0x2d0] sm:$0xff] %v1756
    %1853 = vst [vmem:[#allocation8 + $0x2d8] sm:$0xff] %v1757
    %1854 = vst [vmem:[#allocation8 + $0x2e0] sm:$0xff] %v1758
    %1855 = vst [vmem:[#allocation8 + $0x2e8] sm:$0xff] %v1759
    %1856 = vst [vmem:[#allocation8 + $0x2f0] sm:$0xff] %v1760
    %1857 = vst [vmem:[#allocation8 + $0x2f8] sm:$0xff] %v1761
    // Predicated region
    $region30: #{tpu_custom_call.1} parent=1 // pred_check
      _
    $region31: #{tpu_custom_call.1} parent=1 // pred_check_branch
      %1859 = sbr.rel (0) target = $region33
    $region32: #{tpu_custom_call.1} parent=1 // pred_region
      %1861 = vsyncadd [#allocation4], 0
      %s1862 = sshll.u32 [#allocation8], 4
      %s1863 = int_to_ptr.vmem [resolvable:$true] %s1862
      %s1864 = sshll.u32 %s4, 4
      %s1865 = int_to_ptr.hbm [resolvable:$true] %s1864
      %1870 = dma.vmem_to_hbm [thread:$0]  %s1863, 12288, %s1865, [#allocation4], 256, 256, 16
    $region33: #{tpu_custom_call.1} parent=1 // pred_fallthru
      _
    // Predicated region
    $region34: #{tpu_custom_call.1} parent=1 // pred_check
      _
    $region35: #{tpu_custom_call.1} parent=1 // pred_check_branch
      %1872 = sbr.rel (0) target = $region37
    $region36: #{tpu_custom_call.1} parent=1 // pred_region
      %1874 = dma.done [#allocation4], 12288
    $region37: #{tpu_custom_call.1} parent=1 // pred_fallthru
      _
    %1875 = vsyncpa [#allocation3], 1
    %1876 = vsyncpa [#allocation6], 1
    %1877 = vsyncpa [#allocation4], 1

</llo_original>
